<compile_context>
chip_gen: v7x
topology: tpu7x:2x2x1
jax: 0.10.0
libtpu: 0.0.40
codegen_flags: <defaults>
</compile_context>

<pallas_src>
import functools

import jax
import jax.numpy as jnp
from jax.experimental import pallas as pl
from jax.experimental.pallas import tpu as pltpu


def _round_up(x, m):
    return ((x + m - 1) // m) * m


def _physical_vmem_bytes():
    """Best-effort physical VMEM query (64 MiB conservative fallback)."""
    try:
        return int(pltpu.get_tpu_info().vmem_capacity_bytes)
    except Exception:
        return 64 << 20


def _tiles_for(n, vmem_phys):
    """(n_pad, tm, tk): padded node count, row tile, contraction tile."""
    if n <= 1024:
        # Small graphs: single contraction step, 256-row blocks.
        n_pad = _round_up(n, 256)
        return n_pad, 256, n_pad
    # Large graphs: pad to a 2048 multiple.  tk=2048 keeps the contraction a
    # multiple of 256 (full MXU columns); tm scales with the chip so the A
    # tile is 2 MiB (v5e/v6e) or 4 MiB (v7x, faster HBM => bigger tiles to
    # amortize the ~0.35us per-grid-step overhead).  n_pad//tm >= 2 always,
    # so both v7x TensorCores get row blocks via the "parallel" axis.
    n_pad = _round_up(n, 2048)
    tm = 1024 if vmem_phys <= (64 << 20) else 512
    return n_pad, tm, 2048


def _agg_kernel(a_ref, m_ref, b_ref, out_ref, acc_ref, *, tk, activation):
    """out = act(A_hat @ M + b) for one (row block, contraction block) step.

    a_ref: (tm, tk) bf16 A_hat tile (streamed)
    m_ref: (n_pad, f) bf16 feature matrix (fully VMEM-resident)
    b_ref: (1, f) f32 bias (resident)
    acc_ref: (tm, f) f32 accumulator scratch
    """
    k = pl.program_id(1)

    @pl.when(k == 0)
    def _init():
        acc_ref[...] = jnp.zeros_like(acc_ref)

    start = pl.multiple_of(k * tk, tk)
    m_tile = m_ref[pl.ds(start, tk), :]  # (tk, f), tile-aligned slice of resident M
    acc_ref[...] += jnp.dot(a_ref[...], m_tile, preferred_element_type=jnp.float32)

    @pl.when(k == pl.num_programs(1) - 1)
    def _finalize():
        z = acc_ref[...] + b_ref[...]
        if activation == "relu":
            out_ref[...] = jnp.maximum(z, 0.0).astype(out_ref.dtype)
        else:
            # 2-class log_softmax, closed form: logp_j = -softplus(z_other - z_j).
            # Columns >= 2 are zero padding and are sliced away in the wrapper.
            d = z[:, 1:2] - z[:, 0:1]                               # (tm, 1)
            col = jax.lax.broadcasted_iota(jnp.int32, z.shape, 1)   # (tm, f)
            t = jnp.where(col == 0, d, -d)                          # z_other - z_j
            sp = jnp.maximum(t, 0.0) + jnp.log1p(jnp.exp(-jnp.abs(t)))
            out_ref[...] = (-sp).astype(out_ref.dtype)


def _aggregate(a_hat, m, b, *, tm, tk, vmem_phys, activation, out_dtype):
    n_pad = a_hat.shape[0]
    f = m.shape[1]  # already padded to a multiple of 128 (lane-dense)
    grid = (n_pad // tm, n_pad // tk)

    # VMEM budget: double-buffered A tiles + resident M/bias + out + accumulator.
    working = (
        2 * tm * tk * a_hat.dtype.itemsize          # streamed A (double buffer)
        + 2 * n_pad * f * m.dtype.itemsize          # resident M (budget 2 bufs)
        + 2 * tm * f * jnp.dtype(out_dtype).itemsize
        + 2 * 8 * f * 4                             # bias (sublane padded)
        + tm * f * 4                                # f32 accumulator scratch
    )
    cap = (48 << 20) if vmem_phys <= (64 << 20) else (64 << 20)
    vmem_limit = int(min(max(int(1.5 * working) + (4 << 20), 16 << 20), cap))

    kernel = functools.partial(_agg_kernel, tk=tk, activation=activation)
    return pl.pallas_call(
        kernel,
        out_shape=jax.ShapeDtypeStruct((n_pad, f), out_dtype),
        grid_spec=pltpu.PrefetchScalarGridSpec(
            num_scalar_prefetch=0,
            grid=grid,
            in_specs=[
                pl.BlockSpec((tm, tk), lambda i, k: (i, k)),     # A_hat tile (streamed)
                pl.BlockSpec((n_pad, f), lambda i, k: (0, 0)),   # M (VMEM resident)
                pl.BlockSpec((1, f), lambda i, k: (0, 0)),       # bias (resident)
            ],
            out_specs=pl.BlockSpec((tm, f), lambda i, k: (i, 0)),
            scratch_shapes=[pltpu.VMEM((tm, f), jnp.float32)],
        ),
        compiler_params=pltpu.CompilerParams(
            dimension_semantics=("parallel", "arbitrary"),
            vmem_limit_bytes=vmem_limit,
        ),
    )(a_hat, m, b)


def gnn_maxcut_forward(x, edge_index, params):
    """x: [N, in_dim] f32, edge_index: [2, E] int32  ->  [N, 2] f32 log-probs."""
    w1, b1, w2, b2 = params
    n, _ = x.shape
    hidden = w1.shape[1]

    vmem_phys = _physical_vmem_bytes()
    n_pad, tm, tk = _tiles_for(n, vmem_phys)
    f1_pad = max(_round_up(hidden, 128), 128)
    f2_pad = 128

    # --- glue: dense normalized adjacency D^-1/2 (A + I) D^-1/2, zero-padded ---
    # Degree from a length-N segment sum (no N^2 pass); pre-normalized values
    # scattered once directly into the bf16 adjacency (single N^2 write pass).
    # TODO(synk): for large sparse graphs, feed edge_index as CSR via
    # PrefetchScalarGridSpec and aggregate with a gathered segment-sum instead
    # of materializing the dense O(N^2) adjacency (dense path is the fallback).
    src, dst = edge_index[0], edge_index[1]
    deg = jnp.ones((n,), jnp.float32).at[dst].add(1.0)       # +1 self loop
    dinv = jax.lax.rsqrt(deg)
    diag = jnp.arange(n, dtype=edge_index.dtype)
    rows = jnp.concatenate([dst, diag])
    cols = jnp.concatenate([src, diag])
    vals = jnp.concatenate([dinv[dst] * dinv[src], dinv * dinv])
    a_hat = (
        jnp.zeros((n_pad, n_pad), jnp.bfloat16)
        .at[rows, cols]
        .add(vals.astype(jnp.bfloat16))
    )

    # Layer 1: H = relu(A_hat @ (X @ W1) + b1)   (weight matmul hoisted).
    xw1 = (x @ w1).astype(jnp.bfloat16)                       # (n, hidden)
    m1 = jnp.zeros((n_pad, f1_pad), jnp.bfloat16).at[:n, :hidden].set(xw1)
    b1_pad = jnp.zeros((1, f1_pad), jnp.float32).at[:, : b1.shape[1]].set(b1)
    h = _aggregate(a_hat, m1, b1_pad, tm=tm, tk=tk, vmem_phys=vmem_phys,
                   activation="relu", out_dtype=jnp.bfloat16)  # (n_pad, f1_pad)

    # Layer 2: log_softmax(A_hat @ (H @ W2) + b2)   (weight matmul hoisted).
    # Padded rows of H carry relu(b1) but A_hat's padded columns are zero, so
    # they never contribute to real-node outputs.
    hw2 = (h[:, :hidden].astype(jnp.float32) @ w2).astype(jnp.bfloat16)  # (n_pad, 2)
    m2 = jnp.zeros((n_pad, f2_pad), jnp.bfloat16).at[:, :2].set(hw2)
    b2_pad = jnp.zeros((1, f2_pad), jnp.float32).at[:, :2].set(b2)
    out = _aggregate(a_hat, m2, b2_pad, tm=tm, tk=tk, vmem_phys=vmem_phys,
                     activation="log_softmax", out_dtype=jnp.float32)

    return out[:n, :2]


def init_params(key, in_dim, hidden_dim, out_dim=2):
    k1, k2 = jax.random.split(key)
    s1 = (6.0 / (in_dim + hidden_dim)) ** 0.5
    s2 = (6.0 / (hidden_dim + out_dim)) ** 0.5
    w1 = jax.random.uniform(k1, (in_dim, hidden_dim), jnp.float32, -s1, s1)
    b1 = jnp.zeros((1, hidden_dim), jnp.float32)
    w2 = jax.random.uniform(k2, (hidden_dim, out_dim), jnp.float32, -s2, s2)
    b2 = jnp.zeros((1, out_dim), jnp.float32)
    return (w1, b1, w2, b2)


def _reference_forward(x, edge_index, params):
    w1, b1, w2, b2 = params
    n = x.shape[0]
    src, dst = edge_index[0], edge_index[1]
    adj = jnp.zeros((n, n), jnp.float32).at[dst, src].add(1.0)
    adj = adj + jnp.eye(n, dtype=jnp.float32)
    deg = jnp.sum(adj, axis=1)
    dinv = jnp.where(deg > 0, 1.0 / jnp.sqrt(deg), 0.0)
    a = dinv[:, None] * adj * dinv[None, :]
    h = jax.nn.relu(a @ (x @ w1) + b1)
    z = a @ (h @ w2) + b2
    return jax.nn.log_softmax(z, axis=1)


if __name__ == "__main__":
    N, IN_DIM, HIDDEN = 16, 8, 32

    key = jax.random.PRNGKey(0)
    kx, kp = jax.random.split(key)
    x = jax.random.normal(kx, (N, IN_DIM), jnp.float32)

    # Undirected ring graph: edges (i, i+1 mod N) in both directions.
    idx = jnp.arange(N, dtype=jnp.int32)
    nxt = (idx + 1) % N
    edge_index = jnp.stack(
        [jnp.concatenate([idx, nxt]), jnp.concatenate([nxt, idx])], axis=0
    )  # [2, 2N]

    params = init_params(kp, IN_DIM, HIDDEN, out_dim=2)

    fwd = jax.jit(gnn_maxcut_forward)
    out = jax.block_until_ready(fwd(x, edge_index, params))

    assert out.shape == (N, 2)
    # log_softmax sanity: rows of exp(out) sum to 1.
    assert jnp.allclose(jnp.sum(jnp.exp(out), axis=1), 1.0, atol=1e-4)
    # Match the f32 pure-JAX reference (bf16 A_hat / features -> loose tolerance).
    ref = _reference_forward(x, edge_index, params)
    assert jnp.allclose(out, ref, atol=5e-2), float(jnp.max(jnp.abs(out - ref)))
    print("KERNEL_OK")
</pallas_src>

<mosaic_0001>
module attributes {stable_mosaic.version = 11 : i64} {
  func.func private @main(%arg0: i32) attributes {dimension_semantics = [#tpu.dimension_semantics<core_parallel>], iteration_bounds = array<i64: 2>, tpu.core_type = #tpu.core_type<sc_scalar_subcore>, window_params = []} {
    return
  }
}

module attributes {stable_mosaic.version = 11 : i64} {
  func.func private @main(%arg0: i32) attributes {dimension_semantics = [#tpu.dimension_semantics<core_parallel>], iteration_bounds = array<i64: 2>, tpu.core_type = #tpu.core_type<sc_scalar_subcore>, window_params = []} {
    return
  }
}

module attributes {stable_mosaic.version = 11 : i64} {
  func.func @_agg_kernel(%arg0: i32, %arg1: i32, %arg2: memref<256x256xbf16, #tpu.memory_space<vmem>>, %arg3: memref<256x128xbf16, #tpu.memory_space<vmem>>, %arg4: memref<1x128xf32, #tpu.memory_space<vmem>>, %arg5: memref<256x128xbf16, #tpu.memory_space<vmem>>, %arg6: memref<256x128xf32, #tpu.memory_space<vmem>>) attributes {dimension_semantics = [#tpu.dimension_semantics<parallel>, #tpu.dimension_semantics<arbitrary>], iteration_bounds = array<i64: 1, 1>, scalar_prefetch = 0 : i64, scratch_operands = 1 : i64, tpu.core_type = #tpu.core_type<tc>, window_params = [{transform_indices = @transform_0, window_bounds = array<i64: 256, 256>}, {pipeline_mode = #tpu.pipeline_mode<synchronous>, transform_indices = @transform_1, window_bounds = array<i64: 256, 128>}, {pipeline_mode = #tpu.pipeline_mode<synchronous>, transform_indices = @transform_2, window_bounds = array<i64: 1, 128>}, {transform_indices = @transform_3, window_bounds = array<i64: 256, 128>}]} {
    %c0_i32 = arith.constant 0 : i32
    %0 = arith.cmpi eq, %arg1, %c0_i32 : i32
    %1 = arith.extui %0 : i1 to i32
    %c0_i32_0 = arith.constant 0 : i32
    %2 = arith.cmpi ne, %1, %c0_i32_0 : i32
    scf.if %2 {
      %cst_9 = arith.constant 0.000000e+00 : f32
      %15 = vector.broadcast %cst_9 : f32 to vector<256x128xf32>
      %c0_10 = arith.constant 0 : index
      %c0_11 = arith.constant 0 : index
      %16 = vector.load %arg6[%c0_10, %c0_11] : memref<256x128xf32, #tpu.memory_space<vmem>>, vector<256x128xf32>
      tpu.vector_store %arg6[%c0_10, %c0_11], %15 {strides = array<i32>} : memref<256x128xf32, #tpu.memory_space<vmem>>, vector<256x128xf32>,
    } else {
    }
    %c256_i32 = arith.constant 256 : i32
    %3 = arith.muli %arg1, %c256_i32 : i32
    %4 = tpu.assume_multiple %3, 256 : i32
    %5 = arith.index_cast %4 : i32 to index
    %c0 = arith.constant 0 : index
    %6 = vector.load %arg3[%5, %c0] : memref<256x128xbf16, #tpu.memory_space<vmem>>, vector<256x128xbf16>
    %c0_1 = arith.constant 0 : index
    %c0_2 = arith.constant 0 : index
    %7 = vector.load %arg6[%c0_1, %c0_2] : memref<256x128xf32, #tpu.memory_space<vmem>>, vector<256x128xf32>
    %c0_3 = arith.constant 0 : index
    %c0_4 = arith.constant 0 : index
    %8 = vector.load %arg2[%c0_3, %c0_4] : memref<256x256xbf16, #tpu.memory_space<vmem>>, vector<256x256xbf16>
    %cst = arith.constant dense<0.000000e+00> : vector<256x128xf32>
    %9 = tpu.matmul %8, %6, %cst {dimension_numbers = #tpu.dot_dimension_numbers<[1], [0], [0], [1], [0, 0, 1, 1], [], []>} : vector<256x256xbf16>, vector<256x128xbf16>, vector<256x128xf32> -> vector<256x128xf32>
    %10 = arith.addf %7, %9 : vector<256x128xf32>
    %c0_5 = arith.constant 0 : index
    %c0_6 = arith.constant 0 : index
    %11 = vector.load %arg6[%c0_5, %c0_6] : memref<256x128xf32, #tpu.memory_space<vmem>>, vector<256x128xf32>
    tpu.vector_store %arg6[%c0_5, %c0_6], %10 {strides = array<i32>} : memref<256x128xf32, #tpu.memory_space<vmem>>, vector<256x128xf32>,
    %c0_i32_7 = arith.constant 0 : i32
    %12 = arith.cmpi eq, %arg1, %c0_i32_7 : i32
    %13 = arith.extui %12 : i1 to i32
    %c0_i32_8 = arith.constant 0 : i32
    %14 = arith.cmpi ne, %13, %c0_i32_8 : i32
    scf.if %14 {
      %c0_9 = arith.constant 0 : index
      %c0_10 = arith.constant 0 : index
      %15 = vector.load %arg6[%c0_9, %c0_10] : memref<256x128xf32, #tpu.memory_space<vmem>>, vector<256x128xf32>
      %c0_11 = arith.constant 0 : index
      %c0_12 = arith.constant 0 : index
      %16 = vector.load %arg4[%c0_11, %c0_12] : memref<1x128xf32, #tpu.memory_space<vmem>>, vector<1x128xf32>
      %17 = vector.broadcast %16 : vector<1x128xf32> to vector<256x128xf32>
      %18 = arith.addf %15, %17 : vector<256x128xf32>
      %cst_13 = arith.constant 0.000000e+00 : f32
      %19 = vector.broadcast %cst_13 : f32 to vector<256x128xf32>
      %20 = arith.maximumf %18, %19 : vector<256x128xf32>
      %21 = arith.truncf %20 : vector<256x128xf32> to vector<256x128xbf16>
      %c0_14 = arith.constant 0 : index
      %c0_15 = arith.constant 0 : index
      %22 = vector.load %arg5[%c0_14, %c0_15] : memref<256x128xbf16, #tpu.memory_space<vmem>>, vector<256x128xbf16>
      tpu.vector_store %arg5[%c0_14, %c0_15], %21 {strides = array<i32>} : memref<256x128xbf16, #tpu.memory_space<vmem>>, vector<256x128xbf16>,
    } else {
    }
    return
  }
  func.func @transform_0(%arg0: i32, %arg1: i32) -> (i32, i32) {
    %c0_i32 = arith.constant 0 : i32
    return %arg0, %arg1 : i32, i32
  }
  func.func @transform_1(%arg0: i32, %arg1: i32) -> (i32, i32) {
    %c0_i32 = arith.constant 0 : i32
    %c0_i32_0 = arith.constant 0 : i32
    %c0_i32_1 = arith.constant 0 : i32
    return %c0_i32, %c0_i32_0 : i32, i32
  }
  func.func @transform_2(%arg0: i32, %arg1: i32) -> (i32, i32) {
    %c0_i32 = arith.constant 0 : i32
    %c0_i32_0 = arith.constant 0 : i32
    %c0_i32_1 = arith.constant 0 : i32
    return %c0_i32, %c0_i32_0 : i32, i32
  }
  func.func @transform_3(%arg0: i32, %arg1: i32) -> (i32, i32) {
    %c0_i32 = arith.constant 0 : i32
    %c0_i32_0 = arith.constant 0 : i32
    return %arg0, %c0_i32 : i32, i32
  }
}

module attributes {stable_mosaic.version = 11 : i64} {
  func.func @_agg_kernel(%arg0: i32, %arg1: i32, %arg2: memref<256x256xbf16, #tpu.memory_space<vmem>>, %arg3: memref<256x128xbf16, #tpu.memory_space<vmem>>, %arg4: memref<1x128xf32, #tpu.memory_space<vmem>>, %arg5: memref<256x128xf32, #tpu.memory_space<vmem>>, %arg6: memref<256x128xf32, #tpu.memory_space<vmem>>) attributes {dimension_semantics = [#tpu.dimension_semantics<parallel>, #tpu.dimension_semantics<arbitrary>], iteration_bounds = array<i64: 1, 1>, scalar_prefetch = 0 : i64, scratch_operands = 1 : i64, tpu.core_type = #tpu.core_type<tc>, window_params = [{transform_indices = @transform_0, window_bounds = array<i64: 256, 256>}, {pipeline_mode = #tpu.pipeline_mode<synchronous>, transform_indices = @transform_1, window_bounds = array<i64: 256, 128>}, {pipeline_mode = #tpu.pipeline_mode<synchronous>, transform_indices = @transform_2, window_bounds = array<i64: 1, 128>}, {transform_indices = @transform_3, window_bounds = array<i64: 256, 128>}]} {
    %c0_i32 = arith.constant 0 : i32
    %0 = arith.cmpi eq, %arg1, %c0_i32 : i32
    %1 = arith.extui %0 : i1 to i32
    %c0_i32_0 = arith.constant 0 : i32
    %2 = arith.cmpi ne, %1, %c0_i32_0 : i32
    scf.if %2 {
      %cst_9 = arith.constant 0.000000e+00 : f32
      %15 = vector.broadcast %cst_9 : f32 to vector<256x128xf32>
      %c0_10 = arith.constant 0 : index
      %c0_11 = arith.constant 0 : index
      %16 = vector.load %arg6[%c0_10, %c0_11] : memref<256x128xf32, #tpu.memory_space<vmem>>, vector<256x128xf32>
      tpu.vector_store %arg6[%c0_10, %c0_11], %15 {strides = array<i32>} : memref<256x128xf32, #tpu.memory_space<vmem>>, vector<256x128xf32>,
    } else {
    }
    %c256_i32 = arith.constant 256 : i32
    %3 = arith.muli %arg1, %c256_i32 : i32
    %4 = tpu.assume_multiple %3, 256 : i32
    %5 = arith.index_cast %4 : i32 to index
    %c0 = arith.constant 0 : index
    %6 = vector.load %arg3[%5, %c0] : memref<256x128xbf16, #tpu.memory_space<vmem>>, vector<256x128xbf16>
    %c0_1 = arith.constant 0 : index
    %c0_2 = arith.constant 0 : index
    %7 = vector.load %arg6[%c0_1, %c0_2] : memref<256x128xf32, #tpu.memory_space<vmem>>, vector<256x128xf32>
    %c0_3 = arith.constant 0 : index
    %c0_4 = arith.constant 0 : index
    %8 = vector.load %arg2[%c0_3, %c0_4] : memref<256x256xbf16, #tpu.memory_space<vmem>>, vector<256x256xbf16>
    %cst = arith.constant dense<0.000000e+00> : vector<256x128xf32>
    %9 = tpu.matmul %8, %6, %cst {dimension_numbers = #tpu.dot_dimension_numbers<[1], [0], [0], [1], [0, 0, 1, 1], [], []>} : vector<256x256xbf16>, vector<256x128xbf16>, vector<256x128xf32> -> vector<256x128xf32>
    %10 = arith.addf %7, %9 : vector<256x128xf32>
    %c0_5 = arith.constant 0 : index
    %c0_6 = arith.constant 0 : index
    %11 = vector.load %arg6[%c0_5, %c0_6] : memref<256x128xf32, #tpu.memory_space<vmem>>, vector<256x128xf32>
    tpu.vector_store %arg6[%c0_5, %c0_6], %10 {strides = array<i32>} : memref<256x128xf32, #tpu.memory_space<vmem>>, vector<256x128xf32>,
    %c0_i32_7 = arith.constant 0 : i32
    %12 = arith.cmpi eq, %arg1, %c0_i32_7 : i32
    %13 = arith.extui %12 : i1 to i32
    %c0_i32_8 = arith.constant 0 : i32
    %14 = arith.cmpi ne, %13, %c0_i32_8 : i32
    scf.if %14 {
      %c0_9 = arith.constant 0 : index
      %c0_10 = arith.constant 0 : index
      %15 = vector.load %arg6[%c0_9, %c0_10] : memref<256x128xf32, #tpu.memory_space<vmem>>, vector<256x128xf32>
      %c0_11 = arith.constant 0 : index
      %c0_12 = arith.constant 0 : index
      %16 = vector.load %arg4[%c0_11, %c0_12] : memref<1x128xf32, #tpu.memory_space<vmem>>, vector<1x128xf32>
      %17 = vector.broadcast %16 : vector<1x128xf32> to vector<256x128xf32>
      %18 = arith.addf %15, %17 : vector<256x128xf32>
      %19 = vector.extract_strided_slice %18 {offsets = [0, 1], sizes = [256, 1], strides = [1, 1]} : vector<256x128xf32> to vector<256x1xf32>
      %20 = vector.extract_strided_slice %18 {offsets = [0, 0], sizes = [256, 1], strides = [1, 1]} : vector<256x128xf32> to vector<256x1xf32>
      %21 = arith.subf %19, %20 : vector<256x1xf32>
      %22 = tpu.iota {dimensions = array<i32: 1>} : vector<256x128xi32>
      %c0_i32_13 = arith.constant 0 : i32
      %23 = vector.broadcast %c0_i32_13 : i32 to vector<256x128xi32>
      %24 = arith.cmpi eq, %22, %23 : vector<256x128xi32>
      %cst_14 = arith.constant 0.000000e+00 : f32
      %25 = vector.broadcast %cst_14 : f32 to vector<256x1xf32>
      %26 = arith.subf %25, %21 : vector<256x1xf32>
      %27 = vector.shape_cast %21 : vector<256x1xf32> to vector<256x1xf32>
      %28 = vector.broadcast %27 : vector<256x1xf32> to vector<256x128xf32>
      %29 = vector.shape_cast %26 : vector<256x1xf32> to vector<256x1xf32>
      %30 = vector.broadcast %29 : vector<256x1xf32> to vector<256x128xf32>
      %31 = arith.select %24, %28, %30 : vector<256x128xi1>, vector<256x128xf32>
      %cst_15 = arith.constant 0.000000e+00 : f32
      %32 = vector.broadcast %cst_15 : f32 to vector<256x128xf32>
      %33 = arith.maximumf %31, %32 : vector<256x128xf32>
      %34 = math.absf %31 : vector<256x128xf32>
      %cst_16 = arith.constant 0.000000e+00 : f32
      %35 = vector.broadcast %cst_16 : f32 to vector<256x128xf32>
      %36 = arith.subf %35, %34 : vector<256x128xf32>
      %37 = math.exp %36 : vector<256x128xf32>
      %38 = math.log1p %37 : vector<256x128xf32>
      %39 = arith.addf %33, %38 : vector<256x128xf32>
      %cst_17 = arith.constant 0.000000e+00 : f32
      %40 = vector.broadcast %cst_17 : f32 to vector<256x128xf32>
      %41 = arith.subf %40, %39 : vector<256x128xf32>
      %c0_18 = arith.constant 0 : index
      %c0_19 = arith.constant 0 : index
      %42 = vector.load %arg5[%c0_18, %c0_19] : memref<256x128xf32, #tpu.memory_space<vmem>>, vector<256x128xf32>
      tpu.vector_store %arg5[%c0_18, %c0_19], %41 {strides = array<i32>} : memref<256x128xf32, #tpu.memory_space<vmem>>, vector<256x128xf32>,
    } else {
    }
    return
  }
  func.func @transform_0(%arg0: i32, %arg1: i32) -> (i32, i32) {
    %c0_i32 = arith.constant 0 : i32
    return %arg0, %arg1 : i32, i32
  }
  func.func @transform_1(%arg0: i32, %arg1: i32) -> (i32, i32) {
    %c0_i32 = arith.constant 0 : i32
    %c0_i32_0 = arith.constant 0 : i32
    %c0_i32_1 = arith.constant 0 : i32
    return %c0_i32, %c0_i32_0 : i32, i32
  }
  func.func @transform_2(%arg0: i32, %arg1: i32) -> (i32, i32) {
    %c0_i32 = arith.constant 0 : i32
    %c0_i32_0 = arith.constant 0 : i32
    %c0_i32_1 = arith.constant 0 : i32
    return %c0_i32, %c0_i32_0 : i32, i32
  }
  func.func @transform_3(%arg0: i32, %arg1: i32) -> (i32, i32) {
    %c0_i32 = arith.constant 0 : i32
    %c0_i32_0 = arith.constant 0 : i32
    return %arg0, %c0_i32 : i32, i32
  }
}

</mosaic_0001>

<llo_original>
// kernel: gnn_maxcut_forward.2
$region0: #{gnn_maxcut_forward.2}
  #allocation0 [shape = 'u32[]', space=smem, size = 0x4, offset = 0x4, fixed_abs, tag = 'smem constant byte address 0x4 - core index']
  #allocation1 [shape = 'u32[144,128]{1,0:T(1,128)}', space=vmem, size = 0x12000, scoped, tag = 'internal scratch']
  #allocation2 [shape = 'f32[256,128]{1,0:T(8,128)}', space=vmem, size = 0x20000, scoped, tag = 'scratch operand']
  %s0 = inlined_call_operand.vmem [shape: bf16[256,256], index: 0, kind: input, shape index: {}]
  %s1 = inlined_call_operand.vmem [shape: bf16[256,128], index: 1, kind: input, shape index: {}]
  %s2 = inlined_call_operand.vmem [shape: f32[1,128], index: 2, kind: input, shape index: {}]
  %s3 = inlined_call_operand.vmem [shape: bf16[256,128], index: 3, kind: output, shape index: {}]
  %s4 = sld [smem:[#allocation0]]
  $region30: #{gnn_maxcut_forward.2} parent=0
    _
  %s6 = ssub.s32 1, %s4
  %s7 = scalar_select 0, %s6, %s4
  // Predicated region
  $region2: #{gnn_maxcut_forward.2} parent=0 // pred_check
    _
  $region3: #{gnn_maxcut_forward.2} parent=0 // pred_check_branch
    %9 = sbr.rel (0) target = $region5
  $region4: #{gnn_maxcut_forward.2} parent=0 // pred_region
    _
  $region5: #{gnn_maxcut_forward.2} parent=0 // pred_fallthru
    _
  // Predicated region
  $region6: #{gnn_maxcut_forward.2} parent=0 // pred_check
    _
  $region7: #{gnn_maxcut_forward.2} parent=0 // pred_check_branch
    %11 = sbr.rel (0) target = $region9
  $region8: #{gnn_maxcut_forward.2} parent=0 // pred_region
    _
  $region9: #{gnn_maxcut_forward.2} parent=0 // pred_fallthru
    _
  // Predicated region
  $region10: #{gnn_maxcut_forward.2} parent=0 // pred_check
    _
  $region11: #{gnn_maxcut_forward.2} parent=0 // pred_check_branch
    %13 = sbr.rel (0) target = $region13
  $region12: #{gnn_maxcut_forward.2} parent=0 // pred_region
    _
  $region13: #{gnn_maxcut_forward.2} parent=0 // pred_fallthru
    _
  %p15 = scmp.eq.s32.totalorder 0, 0
  // Predicated region
  $region14: #{gnn_maxcut_forward.2} parent=0 // pred_check
    %p16 = pneg %p15
  $region15: #{gnn_maxcut_forward.2} parent=0 // pred_check_branch
    %18 = sbr.rel (%p16) target = $region17
  $region16: #{gnn_maxcut_forward.2} parent=0 // pred_region
    %19 = vst [vmem:[#allocation2] sm:$0xff] 0.0
    %20 = vst [vmem:[#allocation2 + $0x8] sm:$0xff] 0.0
    %21 = vst [vmem:[#allocation2 + $0x10] sm:$0xff] 0.0
    %22 = vst [vmem:[#allocation2 + $0x18] sm:$0xff] 0.0
    %23 = vst [vmem:[#allocation2 + $0x20] sm:$0xff] 0.0
    %24 = vst [vmem:[#allocation2 + $0x28] sm:$0xff] 0.0
    %25 = vst [vmem:[#allocation2 + $0x30] sm:$0xff] 0.0
    %26 = vst [vmem:[#allocation2 + $0x38] sm:$0xff] 0.0
    %27 = vst [vmem:[#allocation2 + $0x40] sm:$0xff] 0.0
    %28 = vst [vmem:[#allocation2 + $0x48] sm:$0xff] 0.0
    %29 = vst [vmem:[#allocation2 + $0x50] sm:$0xff] 0.0
    %30 = vst [vmem:[#allocation2 + $0x58] sm:$0xff] 0.0
    %31 = vst [vmem:[#allocation2 + $0x60] sm:$0xff] 0.0
    %32 = vst [vmem:[#allocation2 + $0x68] sm:$0xff] 0.0
    %33 = vst [vmem:[#allocation2 + $0x70] sm:$0xff] 0.0
    %34 = vst [vmem:[#allocation2 + $0x78] sm:$0xff] 0.0
    %35 = vst [vmem:[#allocation2 + $0x80] sm:$0xff] 0.0
    %36 = vst [vmem:[#allocation2 + $0x88] sm:$0xff] 0.0
    %37 = vst [vmem:[#allocation2 + $0x90] sm:$0xff] 0.0
    %38 = vst [vmem:[#allocation2 + $0x98] sm:$0xff] 0.0
    %39 = vst [vmem:[#allocation2 + $0xa0] sm:$0xff] 0.0
    %40 = vst [vmem:[#allocation2 + $0xa8] sm:$0xff] 0.0
    %41 = vst [vmem:[#allocation2 + $0xb0] sm:$0xff] 0.0
    %42 = vst [vmem:[#allocation2 + $0xb8] sm:$0xff] 0.0
    %43 = vst [vmem:[#allocation2 + $0xc0] sm:$0xff] 0.0
    %44 = vst [vmem:[#allocation2 + $0xc8] sm:$0xff] 0.0
    %45 = vst [vmem:[#allocation2 + $0xd0] sm:$0xff] 0.0
    %46 = vst [vmem:[#allocation2 + $0xd8] sm:$0xff] 0.0
    %47 = vst [vmem:[#allocation2 + $0xe0] sm:$0xff] 0.0
    %48 = vst [vmem:[#allocation2 + $0xe8] sm:$0xff] 0.0
    %49 = vst [vmem:[#allocation2 + $0xf0] sm:$0xff] 0.0
    %50 = vst [vmem:[#allocation2 + $0xf8] sm:$0xff] 0.0
  $region17: #{gnn_maxcut_forward.2} parent=0 // pred_fallthru
    _
  %s51 = smul.u32 0, 256
  %s52 = sshra.s32 %s51, 3
  %s53 = sand.u32 %s51, 7
  %s54 = smul.addr %s52, 4
  %s55 = scalar_lea.vmem %s1, %s54
  %v56 = vld [vmem:[%s55] sm:$0xf]
  %v57 = vld [vmem:[%s55 + $0x4] sm:$0xf]
  %v58 = vld [vmem:[%s55 + $0x8] sm:$0xf]
  %v59 = vld [vmem:[%s55 + $0xc] sm:$0xf]
  %v60 = vld [vmem:[%s55 + $0x10] sm:$0xf]
  %v61 = vld [vmem:[%s55 + $0x14] sm:$0xf]
  %v62 = vld [vmem:[%s55 + $0x18] sm:$0xf]
  %v63 = vld [vmem:[%s55 + $0x1c] sm:$0xf]
  %v64 = vld [vmem:[%s55 + $0x20] sm:$0xf]
  %v65 = vld [vmem:[%s55 + $0x24] sm:$0xf]
  %v66 = vld [vmem:[%s55 + $0x28] sm:$0xf]
  %v67 = vld [vmem:[%s55 + $0x2c] sm:$0xf]
  %v68 = vld [vmem:[%s55 + $0x30] sm:$0xf]
  %v69 = vld [vmem:[%s55 + $0x34] sm:$0xf]
  %v70 = vld [vmem:[%s55 + $0x38] sm:$0xf]
  %v71 = vld [vmem:[%s55 + $0x3c] sm:$0xf]
  %v72 = vld [vmem:[%s55 + $0x40] sm:$0xf]
  %v73 = vld [vmem:[%s55 + $0x44] sm:$0xf]
  %v74 = vld [vmem:[%s55 + $0x48] sm:$0xf]
  %v75 = vld [vmem:[%s55 + $0x4c] sm:$0xf]
  %v76 = vld [vmem:[%s55 + $0x50] sm:$0xf]
  %v77 = vld [vmem:[%s55 + $0x54] sm:$0xf]
  %v78 = vld [vmem:[%s55 + $0x58] sm:$0xf]
  %v79 = vld [vmem:[%s55 + $0x5c] sm:$0xf]
  %v80 = vld [vmem:[%s55 + $0x60] sm:$0xf]
  %v81 = vld [vmem:[%s55 + $0x64] sm:$0xf]
  %v82 = vld [vmem:[%s55 + $0x68] sm:$0xf]
  %v83 = vld [vmem:[%s55 + $0x6c] sm:$0xf]
  %v84 = vld [vmem:[%s55 + $0x70] sm:$0xf]
  %v85 = vld [vmem:[%s55 + $0x74] sm:$0xf]
  %v86 = vld [vmem:[%s55 + $0x78] sm:$0xf]
  %v87 = vld [vmem:[%s55 + $0x7c] sm:$0xf]
  %v88 = vld [vmem:[#allocation2] sm:$0xff]
  %v89 = vld [vmem:[#allocation2 + $0x8] sm:$0xff]
  %v90 = vld [vmem:[#allocation2 + $0x10] sm:$0xff]
  %v91 = vld [vmem:[#allocation2 + $0x18] sm:$0xff]
  %v92 = vld [vmem:[#allocation2 + $0x20] sm:$0xff]
  %v93 = vld [vmem:[#allocation2 + $0x28] sm:$0xff]
  %v94 = vld [vmem:[#allocation2 + $0x30] sm:$0xff]
  %v95 = vld [vmem:[#allocation2 + $0x38] sm:$0xff]
  %v96 = vld [vmem:[#allocation2 + $0x40] sm:$0xff]
  %v97 = vld [vmem:[#allocation2 + $0x48] sm:$0xff]
  %v98 = vld [vmem:[#allocation2 + $0x50] sm:$0xff]
  %v99 = vld [vmem:[#allocation2 + $0x58] sm:$0xff]
  %v100 = vld [vmem:[#allocation2 + $0x60] sm:$0xff]
  %v101 = vld [vmem:[#allocation2 + $0x68] sm:$0xff]
  %v102 = vld [vmem:[#allocation2 + $0x70] sm:$0xff]
  %v103 = vld [vmem:[#allocation2 + $0x78] sm:$0xff]
  %v104 = vld [vmem:[#allocation2 + $0x80] sm:$0xff]
  %v105 = vld [vmem:[#allocation2 + $0x88] sm:$0xff]
  %v106 = vld [vmem:[#allocation2 + $0x90] sm:$0xff]
  %v107 = vld [vmem:[#allocation2 + $0x98] sm:$0xff]
  %v108 = vld [vmem:[#allocation2 + $0xa0] sm:$0xff]
  %v109 = vld [vmem:[#allocation2 + $0xa8] sm:$0xff]
  %v110 = vld [vmem:[#allocation2 + $0xb0] sm:$0xff]
  %v111 = vld [vmem:[#allocation2 + $0xb8] sm:$0xff]
  %v112 = vld [vmem:[#allocation2 + $0xc0] sm:$0xff]
  %v113 = vld [vmem:[#allocation2 + $0xc8] sm:$0xff]
  %v114 = vld [vmem:[#allocation2 + $0xd0] sm:$0xff]
  %v115 = vld [vmem:[#allocation2 + $0xd8] sm:$0xff]
  %v116 = vld [vmem:[#allocation2 + $0xe0] sm:$0xff]
  %v117 = vld [vmem:[#allocation2 + $0xe8] sm:$0xff]
  %v118 = vld [vmem:[#allocation2 + $0xf0] sm:$0xff]
  %v119 = vld [vmem:[#allocation2 + $0xf8] sm:$0xff]
  %v120 = vld [vmem:[%s0] sm:$0xff]
  %v121 = vld [vmem:[%s0 + $0x8] sm:$0xff]
  %v122 = vld [vmem:[%s0 + $0x10] sm:$0xff]
  %v123 = vld [vmem:[%s0 + $0x18] sm:$0xff]
  %v124 = vld [vmem:[%s0 + $0x20] sm:$0xff]
  %v125 = vld [vmem:[%s0 + $0x28] sm:$0xff]
  %v126 = vld [vmem:[%s0 + $0x30] sm:$0xff]
  %v127 = vld [vmem:[%s0 + $0x38] sm:$0xff]
  %v128 = vld [vmem:[%s0 + $0x40] sm:$0xff]
  %v129 = vld [vmem:[%s0 + $0x48] sm:$0xff]
  %v130 = vld [vmem:[%s0 + $0x50] sm:$0xff]
  %v131 = vld [vmem:[%s0 + $0x58] sm:$0xff]
  %v132 = vld [vmem:[%s0 + $0x60] sm:$0xff]
  %v133 = vld [vmem:[%s0 + $0x68] sm:$0xff]
  %v134 = vld [vmem:[%s0 + $0x70] sm:$0xff]
  %v135 = vld [vmem:[%s0 + $0x78] sm:$0xff]
  %v136 = vld [vmem:[%s0 + $0x80] sm:$0xff]
  %v137 = vld [vmem:[%s0 + $0x88] sm:$0xff]
  %v138 = vld [vmem:[%s0 + $0x90] sm:$0xff]
  %v139 = vld [vmem:[%s0 + $0x98] sm:$0xff]
  %v140 = vld [vmem:[%s0 + $0xa0] sm:$0xff]
  %v141 = vld [vmem:[%s0 + $0xa8] sm:$0xff]
  %v142 = vld [vmem:[%s0 + $0xb0] sm:$0xff]
  %v143 = vld [vmem:[%s0 + $0xb8] sm:$0xff]
  %v144 = vld [vmem:[%s0 + $0xc0] sm:$0xff]
  %v145 = vld [vmem:[%s0 + $0xc8] sm:$0xff]
  %v146 = vld [vmem:[%s0 + $0xd0] sm:$0xff]
  %v147 = vld [vmem:[%s0 + $0xd8] sm:$0xff]
  %v148 = vld [vmem:[%s0 + $0xe0] sm:$0xff]
  %v149 = vld [vmem:[%s0 + $0xe8] sm:$0xff]
  %v150 = vld [vmem:[%s0 + $0xf0] sm:$0xff]
  %v151 = vld [vmem:[%s0 + $0xf8] sm:$0xff]
  %v184 = vunpack.c.l.b16 %v120
  %v185 = vunpack.c.h.b16 %v120
  %v186 = vunpack.c.l.b16 %v121
  %v187 = vunpack.c.h.b16 %v121
  %v188 = vunpack.c.l.b16 %v122
  %v189 = vunpack.c.h.b16 %v122
  %v190 = vunpack.c.l.b16 %v123
  %v191 = vunpack.c.h.b16 %v123
  %v192 = vunpack.c.l.b16 %v124
  %v193 = vunpack.c.h.b16 %v124
  %v194 = vunpack.c.l.b16 %v125
  %v195 = vunpack.c.h.b16 %v125
  %v196 = vunpack.c.l.b16 %v126
  %v197 = vunpack.c.h.b16 %v126
  %v198 = vunpack.c.l.b16 %v127
  %v199 = vunpack.c.h.b16 %v127
  %v200 = vunpack.c.l.b16 %v128
  %v201 = vunpack.c.h.b16 %v128
  %v202 = vunpack.c.l.b16 %v129
  %v203 = vunpack.c.h.b16 %v129
  %v204 = vunpack.c.l.b16 %v130
  %v205 = vunpack.c.h.b16 %v130
  %v206 = vunpack.c.l.b16 %v131
  %v207 = vunpack.c.h.b16 %v131
  %v208 = vunpack.c.l.b16 %v132
  %v209 = vunpack.c.h.b16 %v132
  %v210 = vunpack.c.l.b16 %v133
  %v211 = vunpack.c.h.b16 %v133
  %v212 = vunpack.c.l.b16 %v134
  %v213 = vunpack.c.h.b16 %v134
  %v214 = vunpack.c.l.b16 %v135
  %v215 = vunpack.c.h.b16 %v135
  %v216 = vunpack.c.l.b16 %v136
  %v217 = vunpack.c.h.b16 %v136
  %v218 = vunpack.c.l.b16 %v137
  %v219 = vunpack.c.h.b16 %v137
  %v220 = vunpack.c.l.b16 %v138
  %v221 = vunpack.c.h.b16 %v138
  %v222 = vunpack.c.l.b16 %v139
  %v223 = vunpack.c.h.b16 %v139
  %v224 = vunpack.c.l.b16 %v140
  %v225 = vunpack.c.h.b16 %v140
  %v226 = vunpack.c.l.b16 %v141
  %v227 = vunpack.c.h.b16 %v141
  %v228 = vunpack.c.l.b16 %v142
  %v229 = vunpack.c.h.b16 %v142
  %v230 = vunpack.c.l.b16 %v143
  %v231 = vunpack.c.h.b16 %v143
  %v232 = vunpack.c.l.b16 %v144
  %v233 = vunpack.c.h.b16 %v144
  %v234 = vunpack.c.l.b16 %v145
  %v235 = vunpack.c.h.b16 %v145
  %v236 = vunpack.c.l.b16 %v146
  %v237 = vunpack.c.h.b16 %v146
  %v238 = vunpack.c.l.b16 %v147
  %v239 = vunpack.c.h.b16 %v147
  %v240 = vunpack.c.l.b16 %v148
  %v241 = vunpack.c.h.b16 %v148
  %v242 = vunpack.c.l.b16 %v149
  %v243 = vunpack.c.h.b16 %v149
  %v244 = vunpack.c.l.b16 %v150
  %v245 = vunpack.c.h.b16 %v150
  %v246 = vunpack.c.l.b16 %v151
  %v247 = vunpack.c.h.b16 %v151
  %v248 = vpack.c.b16 %v186, %v184
  %v249 = vpack.c.b16 %v187, %v185
  %v250 = vpack.c.b16 %v190, %v188
  %v251 = vpack.c.b16 %v191, %v189
  %v252 = vpack.c.b16 %v194, %v192
  %v253 = vpack.c.b16 %v195, %v193
  %v254 = vpack.c.b16 %v198, %v196
  %v255 = vpack.c.b16 %v199, %v197
  %v256 = vpack.c.b16 %v202, %v200
  %v257 = vpack.c.b16 %v203, %v201
  %v258 = vpack.c.b16 %v206, %v204
  %v259 = vpack.c.b16 %v207, %v205
  %v260 = vpack.c.b16 %v210, %v208
  %v261 = vpack.c.b16 %v211, %v209
  %v262 = vpack.c.b16 %v214, %v212
  %v263 = vpack.c.b16 %v215, %v213
  %v264 = vpack.c.b16 %v218, %v216
  %v265 = vpack.c.b16 %v219, %v217
  %v266 = vpack.c.b16 %v222, %v220
  %v267 = vpack.c.b16 %v223, %v221
  %v268 = vpack.c.b16 %v226, %v224
  %v269 = vpack.c.b16 %v227, %v225
  %v270 = vpack.c.b16 %v230, %v228
  %v271 = vpack.c.b16 %v231, %v229
  %v272 = vpack.c.b16 %v234, %v232
  %v273 = vpack.c.b16 %v235, %v233
  %v274 = vpack.c.b16 %v238, %v236
  %v275 = vpack.c.b16 %v239, %v237
  %v276 = vpack.c.b16 %v242, %v240
  %v277 = vpack.c.b16 %v243, %v241
  %v278 = vpack.c.b16 %v246, %v244
  %v279 = vpack.c.b16 %v247, %v245
  %v344 = vunpack.c.l.b16 %v56
  %v345 = vunpack.c.l.b16 %v57
  %v346 = vunpack.c.l.b16 %v58
  %v347 = vunpack.c.l.b16 %v59
  %v348 = vunpack.c.l.b16 %v60
  %v349 = vunpack.c.l.b16 %v61
  %v350 = vunpack.c.l.b16 %v62
  %v351 = vunpack.c.l.b16 %v63
  %v352 = vunpack.c.l.b16 %v64
  %v353 = vunpack.c.l.b16 %v65
  %v354 = vunpack.c.l.b16 %v66
  %v355 = vunpack.c.l.b16 %v67
  %v356 = vunpack.c.l.b16 %v68
  %v357 = vunpack.c.l.b16 %v69
  %v358 = vunpack.c.l.b16 %v70
  %v359 = vunpack.c.l.b16 %v71
  %v360 = vunpack.c.l.b16 %v72
  %v361 = vunpack.c.l.b16 %v73
  %v362 = vunpack.c.l.b16 %v74
  %v363 = vunpack.c.l.b16 %v75
  %v364 = vunpack.c.l.b16 %v76
  %v365 = vunpack.c.l.b16 %v77
  %v366 = vunpack.c.l.b16 %v78
  %v367 = vunpack.c.l.b16 %v79
  %v368 = vunpack.c.l.b16 %v80
  %v369 = vunpack.c.l.b16 %v81
  %v370 = vunpack.c.l.b16 %v82
  %v371 = vunpack.c.l.b16 %v83
  %v372 = vunpack.c.l.b16 %v84
  %v373 = vunpack.c.l.b16 %v85
  %v374 = vunpack.c.l.b16 %v86
  %v375 = vunpack.c.l.b16 %v87
  %v376 = vpack.c.b16 %v345, %v344
  %v377 = vpack.c.b16 %v347, %v346
  %v378 = vpack.c.b16 %v349, %v348
  %v379 = vpack.c.b16 %v351, %v350
  %v380 = vpack.c.b16 %v353, %v352
  %v381 = vpack.c.b16 %v355, %v354
  %v382 = vpack.c.b16 %v357, %v356
  %v383 = vpack.c.b16 %v359, %v358
  %v384 = vpack.c.b16 %v361, %v360
  %v385 = vpack.c.b16 %v363, %v362
  %v386 = vpack.c.b16 %v365, %v364
  %v387 = vpack.c.b16 %v367, %v366
  %v388 = vpack.c.b16 %v369, %v368
  %v389 = vpack.c.b16 %v371, %v370
  %v390 = vpack.c.b16 %v373, %v372
  %v391 = vpack.c.b16 %v375, %v374
  %408 = vmatprep.subr.bf16.mxu0 0
  %409 = vmatpush1.bf16.msra.mxu0 %v376
  %410 = vmatprep.subr.bf16.mxu0 0
  %411 = vmatpush1.bf16.msra.mxu0 %v377
  %412 = vmatprep.subr.bf16.mxu0 0
  %413 = vmatpush1.bf16.msra.mxu0 %v378
  %414 = vmatprep.subr.bf16.mxu0 0
  %415 = vmatpush1.bf16.msra.mxu0 %v379
  %416 = vmatprep.subr.bf16.mxu0 0
  %417 = vmatpush1.bf16.msra.mxu0 %v380
  %418 = vmatprep.subr.bf16.mxu0 0
  %419 = vmatpush1.bf16.msra.mxu0 %v381
  %420 = vmatprep.subr.bf16.mxu0 0
  %421 = vmatpush1.bf16.msra.mxu0 %v382
  %422 = vmatprep.subr.bf16.mxu0 0
  %423 = vmatpush1.bf16.msra.mxu0 %v383
  %424 = vmatprep.subr.bf16.mxu0 0
  %425 = vmatpush1.bf16.msra.mxu0 %v384
  %426 = vmatprep.subr.bf16.mxu0 0
  %427 = vmatpush1.bf16.msra.mxu0 %v385
  %428 = vmatprep.subr.bf16.mxu0 0
  %429 = vmatpush1.bf16.msra.mxu0 %v386
  %430 = vmatprep.subr.bf16.mxu0 0
  %431 = vmatpush1.bf16.msra.mxu0 %v387
  %432 = vmatprep.subr.bf16.mxu0 0
  %433 = vmatpush1.bf16.msra.mxu0 %v388
  %434 = vmatprep.subr.bf16.mxu0 0
  %435 = vmatpush1.bf16.msra.mxu0 %v389
  %436 = vmatprep.subr.bf16.mxu0 0
  %437 = vmatpush1.bf16.msra.mxu0 %v390
  %438 = vmatprep.subr.bf16.mxu0 0
  %439 = vmatpush1.bf16.msra.mxu0 %v391
  %440 = vmatprep.mubr.bf16.mxu0 %v249
  %441 = vmatmul.mubr.bf16.gmra.mrb[0].mxu0 %v248
  %v442 = vpop.f32.mrb[0].mxu0
  %v443 = vadd.f32 0.0, %v442
  %v444 = vpop.f32.mrb[0].mxu0
  %v445 = vpop.f32.mrb[0].mxu0
  %v446 = vadd.f32 0.0, %v445
  %v447 = vpop.f32.mrb[0].mxu0
  %448 = vmatprep.mubr.bf16.mxu0 %v251
  %449 = vmatmul.mubr.bf16.gmra.mrb[0].mxu0 %v250
  %v450 = vpop.f32.mrb[0].mxu0
  %v451 = vadd.f32 0.0, %v450
  %v452 = vpop.f32.mrb[0].mxu0
  %v453 = vpop.f32.mrb[0].mxu0
  %v454 = vadd.f32 0.0, %v453
  %v455 = vpop.f32.mrb[0].mxu0
  %456 = vmatprep.mubr.bf16.mxu0 %v253
  %457 = vmatmul.mubr.bf16.gmra.mrb[0].mxu0 %v252
  %v458 = vpop.f32.mrb[0].mxu0
  %v459 = vadd.f32 0.0, %v458
  %v460 = vpop.f32.mrb[0].mxu0
  %v461 = vpop.f32.mrb[0].mxu0
  %v462 = vadd.f32 0.0, %v461
  %v463 = vpop.f32.mrb[0].mxu0
  %464 = vmatprep.mubr.bf16.mxu0 %v255
  %465 = vmatmul.mubr.bf16.gmra.mrb[0].mxu0 %v254
  %v466 = vpop.f32.mrb[0].mxu0
  %v467 = vadd.f32 0.0, %v466
  %v468 = vpop.f32.mrb[0].mxu0
  %v469 = vpop.f32.mrb[0].mxu0
  %v470 = vadd.f32 0.0, %v469
  %v471 = vpop.f32.mrb[0].mxu0
  %472 = vmatprep.mubr.bf16.mxu0 %v257
  %473 = vmatmul.mubr.bf16.gmra.mrb[0].mxu0 %v256
  %v474 = vpop.f32.mrb[0].mxu0
  %v475 = vadd.f32 0.0, %v474
  %v476 = vpop.f32.mrb[0].mxu0
  %v477 = vpop.f32.mrb[0].mxu0
  %v478 = vadd.f32 0.0, %v477
  %v479 = vpop.f32.mrb[0].mxu0
  %480 = vmatprep.mubr.bf16.mxu0 %v259
  %481 = vmatmul.mubr.bf16.gmra.mrb[0].mxu0 %v258
  %v482 = vpop.f32.mrb[0].mxu0
  %v483 = vadd.f32 0.0, %v482
  %v484 = vpop.f32.mrb[0].mxu0
  %v485 = vpop.f32.mrb[0].mxu0
  %v486 = vadd.f32 0.0, %v485
  %v487 = vpop.f32.mrb[0].mxu0
  %488 = vmatprep.mubr.bf16.mxu0 %v261
  %489 = vmatmul.mubr.bf16.gmra.mrb[0].mxu0 %v260
  %v490 = vpop.f32.mrb[0].mxu0
  %v491 = vadd.f32 0.0, %v490
  %v492 = vpop.f32.mrb[0].mxu0
  %v493 = vpop.f32.mrb[0].mxu0
  %v494 = vadd.f32 0.0, %v493
  %v495 = vpop.f32.mrb[0].mxu0
  %496 = vmatprep.mubr.bf16.mxu0 %v263
  %497 = vmatmul.mubr.bf16.gmra.mrb[0].mxu0 %v262
  %v498 = vpop.f32.mrb[0].mxu0
  %v499 = vadd.f32 0.0, %v498
  %v500 = vpop.f32.mrb[0].mxu0
  %v501 = vpop.f32.mrb[0].mxu0
  %v502 = vadd.f32 0.0, %v501
  %v503 = vpop.f32.mrb[0].mxu0
  %504 = vmatprep.mubr.bf16.mxu0 %v265
  %505 = vmatmul.mubr.bf16.gmra.mrb[0].mxu0 %v264
  %v506 = vpop.f32.mrb[0].mxu0
  %v507 = vadd.f32 0.0, %v506
  %v508 = vpop.f32.mrb[0].mxu0
  %v509 = vpop.f32.mrb[0].mxu0
  %v510 = vadd.f32 0.0, %v509
  %v511 = vpop.f32.mrb[0].mxu0
  %512 = vmatprep.mubr.bf16.mxu0 %v267
  %513 = vmatmul.mubr.bf16.gmra.mrb[0].mxu0 %v266
  %v514 = vpop.f32.mrb[0].mxu0
  %v515 = vadd.f32 0.0, %v514
  %v516 = vpop.f32.mrb[0].mxu0
  %v517 = vpop.f32.mrb[0].mxu0
  %v518 = vadd.f32 0.0, %v517
  %v519 = vpop.f32.mrb[0].mxu0
  %520 = vmatprep.mubr.bf16.mxu0 %v269
  %521 = vmatmul.mubr.bf16.gmra.mrb[0].mxu0 %v268
  %v522 = vpop.f32.mrb[0].mxu0
  %v523 = vadd.f32 0.0, %v522
  %v524 = vpop.f32.mrb[0].mxu0
  %v525 = vpop.f32.mrb[0].mxu0
  %v526 = vadd.f32 0.0, %v525
  %v527 = vpop.f32.mrb[0].mxu0
  %528 = vmatprep.mubr.bf16.mxu0 %v271
  %529 = vmatmul.mubr.bf16.gmra.mrb[0].mxu0 %v270
  %v530 = vpop.f32.mrb[0].mxu0
  %v531 = vadd.f32 0.0, %v530
  %v532 = vpop.f32.mrb[0].mxu0
  %v533 = vpop.f32.mrb[0].mxu0
  %v534 = vadd.f32 0.0, %v533
  %v535 = vpop.f32.mrb[0].mxu0
  %536 = vmatprep.mubr.bf16.mxu0 %v273
  %537 = vmatmul.mubr.bf16.gmra.mrb[0].mxu0 %v272
  %v538 = vpop.f32.mrb[0].mxu0
  %v539 = vadd.f32 0.0, %v538
  %v540 = vpop.f32.mrb[0].mxu0
  %v541 = vpop.f32.mrb[0].mxu0
  %v542 = vadd.f32 0.0, %v541
  %v543 = vpop.f32.mrb[0].mxu0
  %544 = vmatprep.mubr.bf16.mxu0 %v275
  %545 = vmatmul.mubr.bf16.gmra.mrb[0].mxu0 %v274
  %v546 = vpop.f32.mrb[0].mxu0
  %v547 = vadd.f32 0.0, %v546
  %v548 = vpop.f32.mrb[0].mxu0
  %v549 = vpop.f32.mrb[0].mxu0
  %v550 = vadd.f32 0.0, %v549
  %v551 = vpop.f32.mrb[0].mxu0
  %552 = vmatprep.mubr.bf16.mxu0 %v277
  %553 = vmatmul.mubr.bf16.gmra.mrb[0].mxu0 %v276
  %v554 = vpop.f32.mrb[0].mxu0
  %v555 = vadd.f32 0.0, %v554
  %v556 = vpop.f32.mrb[0].mxu0
  %v557 = vpop.f32.mrb[0].mxu0
  %v558 = vadd.f32 0.0, %v557
  %v559 = vpop.f32.mrb[0].mxu0
  %560 = vmatprep.mubr.bf16.mxu0 %v279
  %561 = vmatmul.mubr.bf16.gmra.mrb[0].mxu0 %v278
  %v562 = vpop.f32.mrb[0].mxu0
  %v563 = vadd.f32 0.0, %v562
  %v564 = vpop.f32.mrb[0].mxu0
  %v565 = vpop.f32.mrb[0].mxu0
  %v566 = vadd.f32 0.0, %v565
  %v567 = vpop.f32.mrb[0].mxu0
  %568 = vdwg.mxu0
  %v569 = vadd.f32 %v88, %v443
  %v570 = vadd.f32 %v89, %v446
  %v571 = vadd.f32 %v90, %v451
  %v572 = vadd.f32 %v91, %v454
  %v573 = vadd.f32 %v92, %v459
  %v574 = vadd.f32 %v93, %v462
  %v575 = vadd.f32 %v94, %v467
  %v576 = vadd.f32 %v95, %v470
  %v577 = vadd.f32 %v96, %v475
  %v578 = vadd.f32 %v97, %v478
  %v579 = vadd.f32 %v98, %v483
  %v580 = vadd.f32 %v99, %v486
  %v581 = vadd.f32 %v100, %v491
  %v582 = vadd.f32 %v101, %v494
  %v583 = vadd.f32 %v102, %v499
  %v584 = vadd.f32 %v103, %v502
  %v585 = vadd.f32 %v104, %v507
  %v586 = vadd.f32 %v105, %v510
  %v587 = vadd.f32 %v106, %v515
  %v588 = vadd.f32 %v107, %v518
  %v589 = vadd.f32 %v108, %v523
  %v590 = vadd.f32 %v109, %v526
  %v591 = vadd.f32 %v110, %v531
  %v592 = vadd.f32 %v111, %v534
  %v593 = vadd.f32 %v112, %v539
  %v594 = vadd.f32 %v113, %v542
  %v595 = vadd.f32 %v114, %v547
  %v596 = vadd.f32 %v115, %v550
  %v597 = vadd.f32 %v116, %v555
  %v598 = vadd.f32 %v117, %v558
  %v599 = vadd.f32 %v118, %v563
  %v600 = vadd.f32 %v119, %v566
  %601 = vst [vmem:[#allocation2] sm:$0xff] %v569
  %602 = vst [vmem:[#allocation2 + $0x8] sm:$0xff] %v570
  %603 = vst [vmem:[#allocation2 + $0x10] sm:$0xff] %v571
  %604 = vst [vmem:[#allocation2 + $0x18] sm:$0xff] %v572
  %605 = vst [vmem:[#allocation2 + $0x20] sm:$0xff] %v573
  %606 = vst [vmem:[#allocation2 + $0x28] sm:$0xff] %v574
  %607 = vst [vmem:[#allocation2 + $0x30] sm:$0xff] %v575
  %608 = vst [vmem:[#allocation2 + $0x38] sm:$0xff] %v576
  %609 = vst [vmem:[#allocation2 + $0x40] sm:$0xff] %v577
  %610 = vst [vmem:[#allocation2 + $0x48] sm:$0xff] %v578
  %611 = vst [vmem:[#allocation2 + $0x50] sm:$0xff] %v579
  %612 = vst [vmem:[#allocation2 + $0x58] sm:$0xff] %v580
  %613 = vst [vmem:[#allocation2 + $0x60] sm:$0xff] %v581
  %614 = vst [vmem:[#allocation2 + $0x68] sm:$0xff] %v582
  %615 = vst [vmem:[#allocation2 + $0x70] sm:$0xff] %v583
  %616 = vst [vmem:[#allocation2 + $0x78] sm:$0xff] %v584
  %617 = vst [vmem:[#allocation2 + $0x80] sm:$0xff] %v585
  %618 = vst [vmem:[#allocation2 + $0x88] sm:$0xff] %v586
  %619 = vst [vmem:[#allocation2 + $0x90] sm:$0xff] %v587
  %620 = vst [vmem:[#allocation2 + $0x98] sm:$0xff] %v588
  %621 = vst [vmem:[#allocation2 + $0xa0] sm:$0xff] %v589
  %622 = vst [vmem:[#allocation2 + $0xa8] sm:$0xff] %v590
  %623 = vst [vmem:[#allocation2 + $0xb0] sm:$0xff] %v591
  %624 = vst [vmem:[#allocation2 + $0xb8] sm:$0xff] %v592
  %625 = vst [vmem:[#allocation2 + $0xc0] sm:$0xff] %v593
  %626 = vst [vmem:[#allocation2 + $0xc8] sm:$0xff] %v594
  %627 = vst [vmem:[#allocation2 + $0xd0] sm:$0xff] %v595
  %628 = vst [vmem:[#allocation2 + $0xd8] sm:$0xff] %v596
  %629 = vst [vmem:[#allocation2 + $0xe0] sm:$0xff] %v597
  %630 = vst [vmem:[#allocation2 + $0xe8] sm:$0xff] %v598
  %631 = vst [vmem:[#allocation2 + $0xf0] sm:$0xff] %v599
  %632 = vst [vmem:[#allocation2 + $0xf8] sm:$0xff] %v600
  // Predicated region
  $region18: #{gnn_maxcut_forward.2} parent=0 // pred_check
    %p633 = pneg %p15
  $region19: #{gnn_maxcut_forward.2} parent=0 // pred_check_branch
    %635 = sbr.rel (%p633) target = $region21
  $region20: #{gnn_maxcut_forward.2} parent=0 // pred_region
    %v636 = vld [vmem:[#allocation2] sm:$0xff]
    %v637 = vld [vmem:[#allocation2 + $0x8] sm:$0xff]
    %v638 = vld [vmem:[#allocation2 + $0x10] sm:$0xff]
    %v639 = vld [vmem:[#allocation2 + $0x18] sm:$0xff]
    %v640 = vld [vmem:[#allocation2 + $0x20] sm:$0xff]
    %v641 = vld [vmem:[#allocation2 + $0x28] sm:$0xff]
    %v642 = vld [vmem:[#allocation2 + $0x30] sm:$0xff]
    %v643 = vld [vmem:[#allocation2 + $0x38] sm:$0xff]
    %v644 = vld [vmem:[#allocation2 + $0x40] sm:$0xff]
    %v645 = vld [vmem:[#allocation2 + $0x48] sm:$0xff]
    %v646 = vld [vmem:[#allocation2 + $0x50] sm:$0xff]
    %v647 = vld [vmem:[#allocation2 + $0x58] sm:$0xff]
    %v648 = vld [vmem:[#allocation2 + $0x60] sm:$0xff]
    %v649 = vld [vmem:[#allocation2 + $0x68] sm:$0xff]
    %v650 = vld [vmem:[#allocation2 + $0x70] sm:$0xff]
    %v651 = vld [vmem:[#allocation2 + $0x78] sm:$0xff]
    %v652 = vld [vmem:[#allocation2 + $0x80] sm:$0xff]
    %v653 = vld [vmem:[#allocation2 + $0x88] sm:$0xff]
    %v654 = vld [vmem:[#allocation2 + $0x90] sm:$0xff]
    %v655 = vld [vmem:[#allocation2 + $0x98] sm:$0xff]
    %v656 = vld [vmem:[#allocation2 + $0xa0] sm:$0xff]
    %v657 = vld [vmem:[#allocation2 + $0xa8] sm:$0xff]
    %v658 = vld [vmem:[#allocation2 + $0xb0] sm:$0xff]
    %v659 = vld [vmem:[#allocation2 + $0xb8] sm:$0xff]
    %v660 = vld [vmem:[#allocation2 + $0xc0] sm:$0xff]
    %v661 = vld [vmem:[#allocation2 + $0xc8] sm:$0xff]
    %v662 = vld [vmem:[#allocation2 + $0xd0] sm:$0xff]
    %v663 = vld [vmem:[#allocation2 + $0xd8] sm:$0xff]
    %v664 = vld [vmem:[#allocation2 + $0xe0] sm:$0xff]
    %v665 = vld [vmem:[#allocation2 + $0xe8] sm:$0xff]
    %v666 = vld [vmem:[#allocation2 + $0xf0] sm:$0xff]
    %v667 = vld [vmem:[#allocation2 + $0xf8] sm:$0xff]
    %v668 = vld [vmem:[%s2] sm:$0x1]
    %v670 = vlaneseq
    %v671 = vshrl.u32 %v670, 7
    %v672 = vsub.s32 0, %v671
    %v673 = vrot.slane %v668, %v672
    %v675 = vadd.f32 %v636, %v673
    %v676 = vadd.f32 %v637, %v673
    %v677 = vadd.f32 %v638, %v673
    %v678 = vadd.f32 %v639, %v673
    %v679 = vadd.f32 %v640, %v673
    %v680 = vadd.f32 %v641, %v673
    %v681 = vadd.f32 %v642, %v673
    %v682 = vadd.f32 %v643, %v673
    %v683 = vadd.f32 %v644, %v673
    %v684 = vadd.f32 %v645, %v673
    %v685 = vadd.f32 %v646, %v673
    %v686 = vadd.f32 %v647, %v673
    %v687 = vadd.f32 %v648, %v673
    %v688 = vadd.f32 %v649, %v673
    %v689 = vadd.f32 %v650, %v673
    %v690 = vadd.f32 %v651, %v673
    %v691 = vadd.f32 %v652, %v673
    %v692 = vadd.f32 %v653, %v673
    %v693 = vadd.f32 %v654, %v673
    %v694 = vadd.f32 %v655, %v673
    %v695 = vadd.f32 %v656, %v673
    %v696 = vadd.f32 %v657, %v673
    %v697 = vadd.f32 %v658, %v673
    %v698 = vadd.f32 %v659, %v673
    %v699 = vadd.f32 %v660, %v673
    %v700 = vadd.f32 %v661, %v673
    %v701 = vadd.f32 %v662, %v673
    %v702 = vadd.f32 %v663, %v673
    %v703 = vadd.f32 %v664, %v673
    %v704 = vadd.f32 %v665, %v673
    %v705 = vadd.f32 %v666, %v673
    %v706 = vadd.f32 %v667, %v673
    %v707 = vmax.f32 %v675, 0.0
    %v708 = vmax.f32 %v676, 0.0
    %v709 = vmax.f32 %v677, 0.0
    %v710 = vmax.f32 %v678, 0.0
    %v711 = vmax.f32 %v679, 0.0
    %v712 = vmax.f32 %v680, 0.0
    %v713 = vmax.f32 %v681, 0.0
    %v714 = vmax.f32 %v682, 0.0
    %v715 = vmax.f32 %v683, 0.0
    %v716 = vmax.f32 %v684, 0.0
    %v717 = vmax.f32 %v685, 0.0
    %v718 = vmax.f32 %v686, 0.0
    %v719 = vmax.f32 %v687, 0.0
    %v720 = vmax.f32 %v688, 0.0
    %v721 = vmax.f32 %v689, 0.0
    %v722 = vmax.f32 %v690, 0.0
    %v723 = vmax.f32 %v691, 0.0
    %v724 = vmax.f32 %v692, 0.0
    %v725 = vmax.f32 %v693, 0.0
    %v726 = vmax.f32 %v694, 0.0
    %v727 = vmax.f32 %v695, 0.0
    %v728 = vmax.f32 %v696, 0.0
    %v729 = vmax.f32 %v697, 0.0
    %v730 = vmax.f32 %v698, 0.0
    %v731 = vmax.f32 %v699, 0.0
    %v732 = vmax.f32 %v700, 0.0
    %v733 = vmax.f32 %v701, 0.0
    %v734 = vmax.f32 %v702, 0.0
    %v735 = vmax.f32 %v703, 0.0
    %v736 = vmax.f32 %v704, 0.0
    %v737 = vmax.f32 %v705, 0.0
    %v738 = vmax.f32 %v706, 0.0
    %v739 = vpack.c.bf16 %v708, %v707
    %v740 = vpack.c.bf16 %v710, %v709
    %v741 = vpack.c.bf16 %v712, %v711
    %v742 = vpack.c.bf16 %v714, %v713
    %v743 = vpack.c.bf16 %v716, %v715
    %v744 = vpack.c.bf16 %v718, %v717
    %v745 = vpack.c.bf16 %v720, %v719
    %v746 = vpack.c.bf16 %v722, %v721
    %v747 = vpack.c.bf16 %v724, %v723
    %v748 = vpack.c.bf16 %v726, %v725
    %v749 = vpack.c.bf16 %v728, %v727
    %v750 = vpack.c.bf16 %v730, %v729
    %v751 = vpack.c.bf16 %v732, %v731
    %v752 = vpack.c.bf16 %v734, %v733
    %v753 = vpack.c.bf16 %v736, %v735
    %v754 = vpack.c.bf16 %v738, %v737
    %755 = vst [vmem:[%s3] sm:$0xff] %v739
    %756 = vst [vmem:[%s3 + $0x8] sm:$0xff] %v740
    %757 = vst [vmem:[%s3 + $0x10] sm:$0xff] %v741
    %758 = vst [vmem:[%s3 + $0x18] sm:$0xff] %v742
    %759 = vst [vmem:[%s3 + $0x20] sm:$0xff] %v743
    %760 = vst [vmem:[%s3 + $0x28] sm:$0xff] %v744
    %761 = vst [vmem:[%s3 + $0x30] sm:$0xff] %v745
    %762 = vst [vmem:[%s3 + $0x38] sm:$0xff] %v746
    %763 = vst [vmem:[%s3 + $0x40] sm:$0xff] %v747
    %764 = vst [vmem:[%s3 + $0x48] sm:$0xff] %v748
    %765 = vst [vmem:[%s3 + $0x50] sm:$0xff] %v749
    %766 = vst [vmem:[%s3 + $0x58] sm:$0xff] %v750
    %767 = vst [vmem:[%s3 + $0x60] sm:$0xff] %v751
    %768 = vst [vmem:[%s3 + $0x68] sm:$0xff] %v752
    %769 = vst [vmem:[%s3 + $0x70] sm:$0xff] %v753
    %770 = vst [vmem:[%s3 + $0x78] sm:$0xff] %v754
  $region21: #{gnn_maxcut_forward.2} parent=0 // pred_fallthru
    _
  // Predicated region
  $region22: #{gnn_maxcut_forward.2} parent=0 // pred_check
    _
  $region23: #{gnn_maxcut_forward.2} parent=0 // pred_check_branch
    %772 = sbr.rel (0) target = $region25
  $region24: #{gnn_maxcut_forward.2} parent=0 // pred_region
    _
  $region25: #{gnn_maxcut_forward.2} parent=0 // pred_fallthru
    _
  // Predicated region
  $region26: #{gnn_maxcut_forward.2} parent=0 // pred_check
    _
  $region27: #{gnn_maxcut_forward.2} parent=0 // pred_check_branch
    %774 = sbr.rel (0) target = $region29
  $region28: #{gnn_maxcut_forward.2} parent=0 // pred_region
    _
  $region29: #{gnn_maxcut_forward.2} parent=0 // pred_fallthru
    _

// kernel: gnn_maxcut_forward.3
$region0: #{gnn_maxcut_forward.3}
  #allocation0 [shape = 'u32[]', space=smem, size = 0x4, offset = 0x4, fixed_abs, tag = 'smem constant byte address 0x4 - core index']
  #allocation1 [shape = 'u32[144,128]{1,0:T(1,128)}', space=vmem, size = 0x12000, scoped, tag = 'internal scratch']
  #allocation2 [shape = 'f32[256,128]{1,0:T(8,128)}', space=vmem, size = 0x20000, scoped, tag = 'scratch operand']
  %s0 = inlined_call_operand.vmem [shape: bf16[256,256], index: 0, kind: input, shape index: {}]
  %s1 = inlined_call_operand.vmem [shape: bf16[256,128], index: 1, kind: input, shape index: {}]
  %s2 = inlined_call_operand.vmem [shape: f32[1,128], index: 2, kind: input, shape index: {}]
  %s3 = inlined_call_operand.vmem [shape: f32[256,128], index: 3, kind: output, shape index: {}]
  %s4 = sld [smem:[#allocation0]]
  $region30: #{gnn_maxcut_forward.3} parent=0
    _
  %s6 = ssub.s32 1, %s4
  %s7 = scalar_select 0, %s6, %s4
  // Predicated region
  $region2: #{gnn_maxcut_forward.3} parent=0 // pred_check
    _
  $region3: #{gnn_maxcut_forward.3} parent=0 // pred_check_branch
    %9 = sbr.rel (0) target = $region5
  $region4: #{gnn_maxcut_forward.3} parent=0 // pred_region
    _
  $region5: #{gnn_maxcut_forward.3} parent=0 // pred_fallthru
    _
  // Predicated region
  $region6: #{gnn_maxcut_forward.3} parent=0 // pred_check
    _
  $region7: #{gnn_maxcut_forward.3} parent=0 // pred_check_branch
    %11 = sbr.rel (0) target = $region9
  $region8: #{gnn_maxcut_forward.3} parent=0 // pred_region
    _
  $region9: #{gnn_maxcut_forward.3} parent=0 // pred_fallthru
    _
  // Predicated region
  $region10: #{gnn_maxcut_forward.3} parent=0 // pred_check
    _
  $region11: #{gnn_maxcut_forward.3} parent=0 // pred_check_branch
    %13 = sbr.rel (0) target = $region13
  $region12: #{gnn_maxcut_forward.3} parent=0 // pred_region
    _
  $region13: #{gnn_maxcut_forward.3} parent=0 // pred_fallthru
    _
  %p15 = scmp.eq.s32.totalorder 0, 0
  // Predicated region
  $region14: #{gnn_maxcut_forward.3} parent=0 // pred_check
    %p16 = pneg %p15
  $region15: #{gnn_maxcut_forward.3} parent=0 // pred_check_branch
    %18 = sbr.rel (%p16) target = $region17
  $region16: #{gnn_maxcut_forward.3} parent=0 // pred_region
    %19 = vst [vmem:[#allocation2] sm:$0xff] 0.0
    %20 = vst [vmem:[#allocation2 + $0x8] sm:$0xff] 0.0
    %21 = vst [vmem:[#allocation2 + $0x10] sm:$0xff] 0.0
    %22 = vst [vmem:[#allocation2 + $0x18] sm:$0xff] 0.0
    %23 = vst [vmem:[#allocation2 + $0x20] sm:$0xff] 0.0
    %24 = vst [vmem:[#allocation2 + $0x28] sm:$0xff] 0.0
    %25 = vst [vmem:[#allocation2 + $0x30] sm:$0xff] 0.0
    %26 = vst [vmem:[#allocation2 + $0x38] sm:$0xff] 0.0
    %27 = vst [vmem:[#allocation2 + $0x40] sm:$0xff] 0.0
    %28 = vst [vmem:[#allocation2 + $0x48] sm:$0xff] 0.0
    %29 = vst [vmem:[#allocation2 + $0x50] sm:$0xff] 0.0
    %30 = vst [vmem:[#allocation2 + $0x58] sm:$0xff] 0.0
    %31 = vst [vmem:[#allocation2 + $0x60] sm:$0xff] 0.0
    %32 = vst [vmem:[#allocation2 + $0x68] sm:$0xff] 0.0
    %33 = vst [vmem:[#allocation2 + $0x70] sm:$0xff] 0.0
    %34 = vst [vmem:[#allocation2 + $0x78] sm:$0xff] 0.0
    %35 = vst [vmem:[#allocation2 + $0x80] sm:$0xff] 0.0
    %36 = vst [vmem:[#allocation2 + $0x88] sm:$0xff] 0.0
    %37 = vst [vmem:[#allocation2 + $0x90] sm:$0xff] 0.0
    %38 = vst [vmem:[#allocation2 + $0x98] sm:$0xff] 0.0
    %39 = vst [vmem:[#allocation2 + $0xa0] sm:$0xff] 0.0
    %40 = vst [vmem:[#allocation2 + $0xa8] sm:$0xff] 0.0
    %41 = vst [vmem:[#allocation2 + $0xb0] sm:$0xff] 0.0
    %42 = vst [vmem:[#allocation2 + $0xb8] sm:$0xff] 0.0
    %43 = vst [vmem:[#allocation2 + $0xc0] sm:$0xff] 0.0
    %44 = vst [vmem:[#allocation2 + $0xc8] sm:$0xff] 0.0
    %45 = vst [vmem:[#allocation2 + $0xd0] sm:$0xff] 0.0
    %46 = vst [vmem:[#allocation2 + $0xd8] sm:$0xff] 0.0
    %47 = vst [vmem:[#allocation2 + $0xe0] sm:$0xff] 0.0
    %48 = vst [vmem:[#allocation2 + $0xe8] sm:$0xff] 0.0
    %49 = vst [vmem:[#allocation2 + $0xf0] sm:$0xff] 0.0
    %50 = vst [vmem:[#allocation2 + $0xf8] sm:$0xff] 0.0
  $region17: #{gnn_maxcut_forward.3} parent=0 // pred_fallthru
    _
  %s51 = smul.u32 0, 256
  %s52 = sshra.s32 %s51, 3
  %s53 = sand.u32 %s51, 7
  %s54 = smul.addr %s52, 4
  %s55 = scalar_lea.vmem %s1, %s54
  %v56 = vld [vmem:[%s55] sm:$0xf]
  %v57 = vld [vmem:[%s55 + $0x4] sm:$0xf]
  %v58 = vld [vmem:[%s55 + $0x8] sm:$0xf]
  %v59 = vld [vmem:[%s55 + $0xc] sm:$0xf]
  %v60 = vld [vmem:[%s55 + $0x10] sm:$0xf]
  %v61 = vld [vmem:[%s55 + $0x14] sm:$0xf]
  %v62 = vld [vmem:[%s55 + $0x18] sm:$0xf]
  %v63 = vld [vmem:[%s55 + $0x1c] sm:$0xf]
  %v64 = vld [vmem:[%s55 + $0x20] sm:$0xf]
  %v65 = vld [vmem:[%s55 + $0x24] sm:$0xf]
  %v66 = vld [vmem:[%s55 + $0x28] sm:$0xf]
  %v67 = vld [vmem:[%s55 + $0x2c] sm:$0xf]
  %v68 = vld [vmem:[%s55 + $0x30] sm:$0xf]
  %v69 = vld [vmem:[%s55 + $0x34] sm:$0xf]
  %v70 = vld [vmem:[%s55 + $0x38] sm:$0xf]
  %v71 = vld [vmem:[%s55 + $0x3c] sm:$0xf]
  %v72 = vld [vmem:[%s55 + $0x40] sm:$0xf]
  %v73 = vld [vmem:[%s55 + $0x44] sm:$0xf]
  %v74 = vld [vmem:[%s55 + $0x48] sm:$0xf]
  %v75 = vld [vmem:[%s55 + $0x4c] sm:$0xf]
  %v76 = vld [vmem:[%s55 + $0x50] sm:$0xf]
  %v77 = vld [vmem:[%s55 + $0x54] sm:$0xf]
  %v78 = vld [vmem:[%s55 + $0x58] sm:$0xf]
  %v79 = vld [vmem:[%s55 + $0x5c] sm:$0xf]
  %v80 = vld [vmem:[%s55 + $0x60] sm:$0xf]
  %v81 = vld [vmem:[%s55 + $0x64] sm:$0xf]
  %v82 = vld [vmem:[%s55 + $0x68] sm:$0xf]
  %v83 = vld [vmem:[%s55 + $0x6c] sm:$0xf]
  %v84 = vld [vmem:[%s55 + $0x70] sm:$0xf]
  %v85 = vld [vmem:[%s55 + $0x74] sm:$0xf]
  %v86 = vld [vmem:[%s55 + $0x78] sm:$0xf]
  %v87 = vld [vmem:[%s55 + $0x7c] sm:$0xf]
  %v88 = vld [vmem:[#allocation2] sm:$0xff]
  %v89 = vld [vmem:[#allocation2 + $0x8] sm:$0xff]
  %v90 = vld [vmem:[#allocation2 + $0x10] sm:$0xff]
  %v91 = vld [vmem:[#allocation2 + $0x18] sm:$0xff]
  %v92 = vld [vmem:[#allocation2 + $0x20] sm:$0xff]
  %v93 = vld [vmem:[#allocation2 + $0x28] sm:$0xff]
  %v94 = vld [vmem:[#allocation2 + $0x30] sm:$0xff]
  %v95 = vld [vmem:[#allocation2 + $0x38] sm:$0xff]
  %v96 = vld [vmem:[#allocation2 + $0x40] sm:$0xff]
  %v97 = vld [vmem:[#allocation2 + $0x48] sm:$0xff]
  %v98 = vld [vmem:[#allocation2 + $0x50] sm:$0xff]
  %v99 = vld [vmem:[#allocation2 + $0x58] sm:$0xff]
  %v100 = vld [vmem:[#allocation2 + $0x60] sm:$0xff]
  %v101 = vld [vmem:[#allocation2 + $0x68] sm:$0xff]
  %v102 = vld [vmem:[#allocation2 + $0x70] sm:$0xff]
  %v103 = vld [vmem:[#allocation2 + $0x78] sm:$0xff]
  %v104 = vld [vmem:[#allocation2 + $0x80] sm:$0xff]
  %v105 = vld [vmem:[#allocation2 + $0x88] sm:$0xff]
  %v106 = vld [vmem:[#allocation2 + $0x90] sm:$0xff]
  %v107 = vld [vmem:[#allocation2 + $0x98] sm:$0xff]
  %v108 = vld [vmem:[#allocation2 + $0xa0] sm:$0xff]
  %v109 = vld [vmem:[#allocation2 + $0xa8] sm:$0xff]
  %v110 = vld [vmem:[#allocation2 + $0xb0] sm:$0xff]
  %v111 = vld [vmem:[#allocation2 + $0xb8] sm:$0xff]
  %v112 = vld [vmem:[#allocation2 + $0xc0] sm:$0xff]
  %v113 = vld [vmem:[#allocation2 + $0xc8] sm:$0xff]
  %v114 = vld [vmem:[#allocation2 + $0xd0] sm:$0xff]
  %v115 = vld [vmem:[#allocation2 + $0xd8] sm:$0xff]
  %v116 = vld [vmem:[#allocation2 + $0xe0] sm:$0xff]
  %v117 = vld [vmem:[#allocation2 + $0xe8] sm:$0xff]
  %v118 = vld [vmem:[#allocation2 + $0xf0] sm:$0xff]
  %v119 = vld [vmem:[#allocation2 + $0xf8] sm:$0xff]
  %v120 = vld [vmem:[%s0] sm:$0xff]
  %v121 = vld [vmem:[%s0 + $0x8] sm:$0xff]
  %v122 = vld [vmem:[%s0 + $0x10] sm:$0xff]
  %v123 = vld [vmem:[%s0 + $0x18] sm:$0xff]
  %v124 = vld [vmem:[%s0 + $0x20] sm:$0xff]
  %v125 = vld [vmem:[%s0 + $0x28] sm:$0xff]
  %v126 = vld [vmem:[%s0 + $0x30] sm:$0xff]
  %v127 = vld [vmem:[%s0 + $0x38] sm:$0xff]
  %v128 = vld [vmem:[%s0 + $0x40] sm:$0xff]
  %v129 = vld [vmem:[%s0 + $0x48] sm:$0xff]
  %v130 = vld [vmem:[%s0 + $0x50] sm:$0xff]
  %v131 = vld [vmem:[%s0 + $0x58] sm:$0xff]
  %v132 = vld [vmem:[%s0 + $0x60] sm:$0xff]
  %v133 = vld [vmem:[%s0 + $0x68] sm:$0xff]
  %v134 = vld [vmem:[%s0 + $0x70] sm:$0xff]
  %v135 = vld [vmem:[%s0 + $0x78] sm:$0xff]
  %v136 = vld [vmem:[%s0 + $0x80] sm:$0xff]
  %v137 = vld [vmem:[%s0 + $0x88] sm:$0xff]
  %v138 = vld [vmem:[%s0 + $0x90] sm:$0xff]
  %v139 = vld [vmem:[%s0 + $0x98] sm:$0xff]
  %v140 = vld [vmem:[%s0 + $0xa0] sm:$0xff]
  %v141 = vld [vmem:[%s0 + $0xa8] sm:$0xff]
  %v142 = vld [vmem:[%s0 + $0xb0] sm:$0xff]
  %v143 = vld [vmem:[%s0 + $0xb8] sm:$0xff]
  %v144 = vld [vmem:[%s0 + $0xc0] sm:$0xff]
  %v145 = vld [vmem:[%s0 + $0xc8] sm:$0xff]
  %v146 = vld [vmem:[%s0 + $0xd0] sm:$0xff]
  %v147 = vld [vmem:[%s0 + $0xd8] sm:$0xff]
  %v148 = vld [vmem:[%s0 + $0xe0] sm:$0xff]
  %v149 = vld [vmem:[%s0 + $0xe8] sm:$0xff]
  %v150 = vld [vmem:[%s0 + $0xf0] sm:$0xff]
  %v151 = vld [vmem:[%s0 + $0xf8] sm:$0xff]
  %v184 = vunpack.c.l.b16 %v120
  %v185 = vunpack.c.h.b16 %v120
  %v186 = vunpack.c.l.b16 %v121
  %v187 = vunpack.c.h.b16 %v121
  %v188 = vunpack.c.l.b16 %v122
  %v189 = vunpack.c.h.b16 %v122
  %v190 = vunpack.c.l.b16 %v123
  %v191 = vunpack.c.h.b16 %v123
  %v192 = vunpack.c.l.b16 %v124
  %v193 = vunpack.c.h.b16 %v124
  %v194 = vunpack.c.l.b16 %v125
  %v195 = vunpack.c.h.b16 %v125
  %v196 = vunpack.c.l.b16 %v126
  %v197 = vunpack.c.h.b16 %v126
  %v198 = vunpack.c.l.b16 %v127
  %v199 = vunpack.c.h.b16 %v127
  %v200 = vunpack.c.l.b16 %v128
  %v201 = vunpack.c.h.b16 %v128
  %v202 = vunpack.c.l.b16 %v129
  %v203 = vunpack.c.h.b16 %v129
  %v204 = vunpack.c.l.b16 %v130
  %v205 = vunpack.c.h.b16 %v130
  %v206 = vunpack.c.l.b16 %v131
  %v207 = vunpack.c.h.b16 %v131
  %v208 = vunpack.c.l.b16 %v132
  %v209 = vunpack.c.h.b16 %v132
  %v210 = vunpack.c.l.b16 %v133
  %v211 = vunpack.c.h.b16 %v133
  %v212 = vunpack.c.l.b16 %v134
  %v213 = vunpack.c.h.b16 %v134
  %v214 = vunpack.c.l.b16 %v135
  %v215 = vunpack.c.h.b16 %v135
  %v216 = vunpack.c.l.b16 %v136
  %v217 = vunpack.c.h.b16 %v136
  %v218 = vunpack.c.l.b16 %v137
  %v219 = vunpack.c.h.b16 %v137
  %v220 = vunpack.c.l.b16 %v138
  %v221 = vunpack.c.h.b16 %v138
  %v222 = vunpack.c.l.b16 %v139
  %v223 = vunpack.c.h.b16 %v139
  %v224 = vunpack.c.l.b16 %v140
  %v225 = vunpack.c.h.b16 %v140
  %v226 = vunpack.c.l.b16 %v141
  %v227 = vunpack.c.h.b16 %v141
  %v228 = vunpack.c.l.b16 %v142
  %v229 = vunpack.c.h.b16 %v142
  %v230 = vunpack.c.l.b16 %v143
  %v231 = vunpack.c.h.b16 %v143
  %v232 = vunpack.c.l.b16 %v144
  %v233 = vunpack.c.h.b16 %v144
  %v234 = vunpack.c.l.b16 %v145
  %v235 = vunpack.c.h.b16 %v145
  %v236 = vunpack.c.l.b16 %v146
  %v237 = vunpack.c.h.b16 %v146
  %v238 = vunpack.c.l.b16 %v147
  %v239 = vunpack.c.h.b16 %v147
  %v240 = vunpack.c.l.b16 %v148
  %v241 = vunpack.c.h.b16 %v148
  %v242 = vunpack.c.l.b16 %v149
  %v243 = vunpack.c.h.b16 %v149
  %v244 = vunpack.c.l.b16 %v150
  %v245 = vunpack.c.h.b16 %v150
  %v246 = vunpack.c.l.b16 %v151
  %v247 = vunpack.c.h.b16 %v151
  %v248 = vpack.c.b16 %v186, %v184
  %v249 = vpack.c.b16 %v187, %v185
  %v250 = vpack.c.b16 %v190, %v188
  %v251 = vpack.c.b16 %v191, %v189
  %v252 = vpack.c.b16 %v194, %v192
  %v253 = vpack.c.b16 %v195, %v193
  %v254 = vpack.c.b16 %v198, %v196
  %v255 = vpack.c.b16 %v199, %v197
  %v256 = vpack.c.b16 %v202, %v200
  %v257 = vpack.c.b16 %v203, %v201
  %v258 = vpack.c.b16 %v206, %v204
  %v259 = vpack.c.b16 %v207, %v205
  %v260 = vpack.c.b16 %v210, %v208
  %v261 = vpack.c.b16 %v211, %v209
  %v262 = vpack.c.b16 %v214, %v212
  %v263 = vpack.c.b16 %v215, %v213
  %v264 = vpack.c.b16 %v218, %v216
  %v265 = vpack.c.b16 %v219, %v217
  %v266 = vpack.c.b16 %v222, %v220
  %v267 = vpack.c.b16 %v223, %v221
  %v268 = vpack.c.b16 %v226, %v224
  %v269 = vpack.c.b16 %v227, %v225
  %v270 = vpack.c.b16 %v230, %v228
  %v271 = vpack.c.b16 %v231, %v229
  %v272 = vpack.c.b16 %v234, %v232
  %v273 = vpack.c.b16 %v235, %v233
  %v274 = vpack.c.b16 %v238, %v236
  %v275 = vpack.c.b16 %v239, %v237
  %v276 = vpack.c.b16 %v242, %v240
  %v277 = vpack.c.b16 %v243, %v241
  %v278 = vpack.c.b16 %v246, %v244
  %v279 = vpack.c.b16 %v247, %v245
  %v344 = vunpack.c.l.b16 %v56
  %v345 = vunpack.c.l.b16 %v57
  %v346 = vunpack.c.l.b16 %v58
  %v347 = vunpack.c.l.b16 %v59
  %v348 = vunpack.c.l.b16 %v60
  %v349 = vunpack.c.l.b16 %v61
  %v350 = vunpack.c.l.b16 %v62
  %v351 = vunpack.c.l.b16 %v63
  %v352 = vunpack.c.l.b16 %v64
  %v353 = vunpack.c.l.b16 %v65
  %v354 = vunpack.c.l.b16 %v66
  %v355 = vunpack.c.l.b16 %v67
  %v356 = vunpack.c.l.b16 %v68
  %v357 = vunpack.c.l.b16 %v69
  %v358 = vunpack.c.l.b16 %v70
  %v359 = vunpack.c.l.b16 %v71
  %v360 = vunpack.c.l.b16 %v72
  %v361 = vunpack.c.l.b16 %v73
  %v362 = vunpack.c.l.b16 %v74
  %v363 = vunpack.c.l.b16 %v75
  %v364 = vunpack.c.l.b16 %v76
  %v365 = vunpack.c.l.b16 %v77
  %v366 = vunpack.c.l.b16 %v78
  %v367 = vunpack.c.l.b16 %v79
  %v368 = vunpack.c.l.b16 %v80
  %v369 = vunpack.c.l.b16 %v81
  %v370 = vunpack.c.l.b16 %v82
  %v371 = vunpack.c.l.b16 %v83
  %v372 = vunpack.c.l.b16 %v84
  %v373 = vunpack.c.l.b16 %v85
  %v374 = vunpack.c.l.b16 %v86
  %v375 = vunpack.c.l.b16 %v87
  %v376 = vpack.c.b16 %v345, %v344
  %v377 = vpack.c.b16 %v347, %v346
  %v378 = vpack.c.b16 %v349, %v348
  %v379 = vpack.c.b16 %v351, %v350
  %v380 = vpack.c.b16 %v353, %v352
  %v381 = vpack.c.b16 %v355, %v354
  %v382 = vpack.c.b16 %v357, %v356
  %v383 = vpack.c.b16 %v359, %v358
  %v384 = vpack.c.b16 %v361, %v360
  %v385 = vpack.c.b16 %v363, %v362
  %v386 = vpack.c.b16 %v365, %v364
  %v387 = vpack.c.b16 %v367, %v366
  %v388 = vpack.c.b16 %v369, %v368
  %v389 = vpack.c.b16 %v371, %v370
  %v390 = vpack.c.b16 %v373, %v372
  %v391 = vpack.c.b16 %v375, %v374
  %408 = vmatprep.subr.bf16.mxu0 0
  %409 = vmatpush1.bf16.msra.mxu0 %v376
  %410 = vmatprep.subr.bf16.mxu0 0
  %411 = vmatpush1.bf16.msra.mxu0 %v377
  %412 = vmatprep.subr.bf16.mxu0 0
  %413 = vmatpush1.bf16.msra.mxu0 %v378
  %414 = vmatprep.subr.bf16.mxu0 0
  %415 = vmatpush1.bf16.msra.mxu0 %v379
  %416 = vmatprep.subr.bf16.mxu0 0
  %417 = vmatpush1.bf16.msra.mxu0 %v380
  %418 = vmatprep.subr.bf16.mxu0 0
  %419 = vmatpush1.bf16.msra.mxu0 %v381
  %420 = vmatprep.subr.bf16.mxu0 0
  %421 = vmatpush1.bf16.msra.mxu0 %v382
  %422 = vmatprep.subr.bf16.mxu0 0
  %423 = vmatpush1.bf16.msra.mxu0 %v383
  %424 = vmatprep.subr.bf16.mxu0 0
  %425 = vmatpush1.bf16.msra.mxu0 %v384
  %426 = vmatprep.subr.bf16.mxu0 0
  %427 = vmatpush1.bf16.msra.mxu0 %v385
  %428 = vmatprep.subr.bf16.mxu0 0
  %429 = vmatpush1.bf16.msra.mxu0 %v386
  %430 = vmatprep.subr.bf16.mxu0 0
  %431 = vmatpush1.bf16.msra.mxu0 %v387
  %432 = vmatprep.subr.bf16.mxu0 0
  %433 = vmatpush1.bf16.msra.mxu0 %v388
  %434 = vmatprep.subr.bf16.mxu0 0
  %435 = vmatpush1.bf16.msra.mxu0 %v389
  %436 = vmatprep.subr.bf16.mxu0 0
  %437 = vmatpush1.bf16.msra.mxu0 %v390
  %438 = vmatprep.subr.bf16.mxu0 0
  %439 = vmatpush1.bf16.msra.mxu0 %v391
  %440 = vmatprep.mubr.bf16.mxu0 %v249
  %441 = vmatmul.mubr.bf16.gmra.mrb[0].mxu0 %v248
  %v442 = vpop.f32.mrb[0].mxu0
  %v443 = vadd.f32 0.0, %v442
  %v444 = vpop.f32.mrb[0].mxu0
  %v445 = vpop.f32.mrb[0].mxu0
  %v446 = vadd.f32 0.0, %v445
  %v447 = vpop.f32.mrb[0].mxu0
  %448 = vmatprep.mubr.bf16.mxu0 %v251
  %449 = vmatmul.mubr.bf16.gmra.mrb[0].mxu0 %v250
  %v450 = vpop.f32.mrb[0].mxu0
  %v451 = vadd.f32 0.0, %v450
  %v452 = vpop.f32.mrb[0].mxu0
  %v453 = vpop.f32.mrb[0].mxu0
  %v454 = vadd.f32 0.0, %v453
  %v455 = vpop.f32.mrb[0].mxu0
  %456 = vmatprep.mubr.bf16.mxu0 %v253
  %457 = vmatmul.mubr.bf16.gmra.mrb[0].mxu0 %v252
  %v458 = vpop.f32.mrb[0].mxu0
  %v459 = vadd.f32 0.0, %v458
  %v460 = vpop.f32.mrb[0].mxu0
  %v461 = vpop.f32.mrb[0].mxu0
  %v462 = vadd.f32 0.0, %v461
  %v463 = vpop.f32.mrb[0].mxu0
  %464 = vmatprep.mubr.bf16.mxu0 %v255
  %465 = vmatmul.mubr.bf16.gmra.mrb[0].mxu0 %v254
  %v466 = vpop.f32.mrb[0].mxu0
  %v467 = vadd.f32 0.0, %v466
  %v468 = vpop.f32.mrb[0].mxu0
  %v469 = vpop.f32.mrb[0].mxu0
  %v470 = vadd.f32 0.0, %v469
  %v471 = vpop.f32.mrb[0].mxu0
  %472 = vmatprep.mubr.bf16.mxu0 %v257
  %473 = vmatmul.mubr.bf16.gmra.mrb[0].mxu0 %v256
  %v474 = vpop.f32.mrb[0].mxu0
  %v475 = vadd.f32 0.0, %v474
  %v476 = vpop.f32.mrb[0].mxu0
  %v477 = vpop.f32.mrb[0].mxu0
  %v478 = vadd.f32 0.0, %v477
  %v479 = vpop.f32.mrb[0].mxu0
  %480 = vmatprep.mubr.bf16.mxu0 %v259
  %481 = vmatmul.mubr.bf16.gmra.mrb[0].mxu0 %v258
  %v482 = vpop.f32.mrb[0].mxu0
  %v483 = vadd.f32 0.0, %v482
  %v484 = vpop.f32.mrb[0].mxu0
  %v485 = vpop.f32.mrb[0].mxu0
  %v486 = vadd.f32 0.0, %v485
  %v487 = vpop.f32.mrb[0].mxu0
  %488 = vmatprep.mubr.bf16.mxu0 %v261
  %489 = vmatmul.mubr.bf16.gmra.mrb[0].mxu0 %v260
  %v490 = vpop.f32.mrb[0].mxu0
  %v491 = vadd.f32 0.0, %v490
  %v492 = vpop.f32.mrb[0].mxu0
  %v493 = vpop.f32.mrb[0].mxu0
  %v494 = vadd.f32 0.0, %v493
  %v495 = vpop.f32.mrb[0].mxu0
  %496 = vmatprep.mubr.bf16.mxu0 %v263
  %497 = vmatmul.mubr.bf16.gmra.mrb[0].mxu0 %v262
  %v498 = vpop.f32.mrb[0].mxu0
  %v499 = vadd.f32 0.0, %v498
  %v500 = vpop.f32.mrb[0].mxu0
  %v501 = vpop.f32.mrb[0].mxu0
  %v502 = vadd.f32 0.0, %v501
  %v503 = vpop.f32.mrb[0].mxu0
  %504 = vmatprep.mubr.bf16.mxu0 %v265
  %505 = vmatmul.mubr.bf16.gmra.mrb[0].mxu0 %v264
  %v506 = vpop.f32.mrb[0].mxu0
  %v507 = vadd.f32 0.0, %v506
  %v508 = vpop.f32.mrb[0].mxu0
  %v509 = vpop.f32.mrb[0].mxu0
  %v510 = vadd.f32 0.0, %v509
  %v511 = vpop.f32.mrb[0].mxu0
  %512 = vmatprep.mubr.bf16.mxu0 %v267
  %513 = vmatmul.mubr.bf16.gmra.mrb[0].mxu0 %v266
  %v514 = vpop.f32.mrb[0].mxu0
  %v515 = vadd.f32 0.0, %v514
  %v516 = vpop.f32.mrb[0].mxu0
  %v517 = vpop.f32.mrb[0].mxu0
  %v518 = vadd.f32 0.0, %v517
  %v519 = vpop.f32.mrb[0].mxu0
  %520 = vmatprep.mubr.bf16.mxu0 %v269
  %521 = vmatmul.mubr.bf16.gmra.mrb[0].mxu0 %v268
  %v522 = vpop.f32.mrb[0].mxu0
  %v523 = vadd.f32 0.0, %v522
  %v524 = vpop.f32.mrb[0].mxu0
  %v525 = vpop.f32.mrb[0].mxu0
  %v526 = vadd.f32 0.0, %v525
  %v527 = vpop.f32.mrb[0].mxu0
  %528 = vmatprep.mubr.bf16.mxu0 %v271
  %529 = vmatmul.mubr.bf16.gmra.mrb[0].mxu0 %v270
  %v530 = vpop.f32.mrb[0].mxu0
  %v531 = vadd.f32 0.0, %v530
  %v532 = vpop.f32.mrb[0].mxu0
  %v533 = vpop.f32.mrb[0].mxu0
  %v534 = vadd.f32 0.0, %v533
  %v535 = vpop.f32.mrb[0].mxu0
  %536 = vmatprep.mubr.bf16.mxu0 %v273
  %537 = vmatmul.mubr.bf16.gmra.mrb[0].mxu0 %v272
  %v538 = vpop.f32.mrb[0].mxu0
  %v539 = vadd.f32 0.0, %v538
  %v540 = vpop.f32.mrb[0].mxu0
  %v541 = vpop.f32.mrb[0].mxu0
  %v542 = vadd.f32 0.0, %v541
  %v543 = vpop.f32.mrb[0].mxu0
  %544 = vmatprep.mubr.bf16.mxu0 %v275
  %545 = vmatmul.mubr.bf16.gmra.mrb[0].mxu0 %v274
  %v546 = vpop.f32.mrb[0].mxu0
  %v547 = vadd.f32 0.0, %v546
  %v548 = vpop.f32.mrb[0].mxu0
  %v549 = vpop.f32.mrb[0].mxu0
  %v550 = vadd.f32 0.0, %v549
  %v551 = vpop.f32.mrb[0].mxu0
  %552 = vmatprep.mubr.bf16.mxu0 %v277
  %553 = vmatmul.mubr.bf16.gmra.mrb[0].mxu0 %v276
  %v554 = vpop.f32.mrb[0].mxu0
  %v555 = vadd.f32 0.0, %v554
  %v556 = vpop.f32.mrb[0].mxu0
  %v557 = vpop.f32.mrb[0].mxu0
  %v558 = vadd.f32 0.0, %v557
  %v559 = vpop.f32.mrb[0].mxu0
  %560 = vmatprep.mubr.bf16.mxu0 %v279
  %561 = vmatmul.mubr.bf16.gmra.mrb[0].mxu0 %v278
  %v562 = vpop.f32.mrb[0].mxu0
  %v563 = vadd.f32 0.0, %v562
  %v564 = vpop.f32.mrb[0].mxu0
  %v565 = vpop.f32.mrb[0].mxu0
  %v566 = vadd.f32 0.0, %v565
  %v567 = vpop.f32.mrb[0].mxu0
  %568 = vdwg.mxu0
  %v569 = vadd.f32 %v88, %v443
  %v570 = vadd.f32 %v89, %v446
  %v571 = vadd.f32 %v90, %v451
  %v572 = vadd.f32 %v91, %v454
  %v573 = vadd.f32 %v92, %v459
  %v574 = vadd.f32 %v93, %v462
  %v575 = vadd.f32 %v94, %v467
  %v576 = vadd.f32 %v95, %v470
  %v577 = vadd.f32 %v96, %v475
  %v578 = vadd.f32 %v97, %v478
  %v579 = vadd.f32 %v98, %v483
  %v580 = vadd.f32 %v99, %v486
  %v581 = vadd.f32 %v100, %v491
  %v582 = vadd.f32 %v101, %v494
  %v583 = vadd.f32 %v102, %v499
  %v584 = vadd.f32 %v103, %v502
  %v585 = vadd.f32 %v104, %v507
  %v586 = vadd.f32 %v105, %v510
  %v587 = vadd.f32 %v106, %v515
  %v588 = vadd.f32 %v107, %v518
  %v589 = vadd.f32 %v108, %v523
  %v590 = vadd.f32 %v109, %v526
  %v591 = vadd.f32 %v110, %v531
  %v592 = vadd.f32 %v111, %v534
  %v593 = vadd.f32 %v112, %v539
  %v594 = vadd.f32 %v113, %v542
  %v595 = vadd.f32 %v114, %v547
  %v596 = vadd.f32 %v115, %v550
  %v597 = vadd.f32 %v116, %v555
  %v598 = vadd.f32 %v117, %v558
  %v599 = vadd.f32 %v118, %v563
  %v600 = vadd.f32 %v119, %v566
  %601 = vst [vmem:[#allocation2] sm:$0xff] %v569
  %602 = vst [vmem:[#allocation2 + $0x8] sm:$0xff] %v570
  %603 = vst [vmem:[#allocation2 + $0x10] sm:$0xff] %v571
  %604 = vst [vmem:[#allocation2 + $0x18] sm:$0xff] %v572
  %605 = vst [vmem:[#allocation2 + $0x20] sm:$0xff] %v573
  %606 = vst [vmem:[#allocation2 + $0x28] sm:$0xff] %v574
  %607 = vst [vmem:[#allocation2 + $0x30] sm:$0xff] %v575
  %608 = vst [vmem:[#allocation2 + $0x38] sm:$0xff] %v576
  %609 = vst [vmem:[#allocation2 + $0x40] sm:$0xff] %v577
  %610 = vst [vmem:[#allocation2 + $0x48] sm:$0xff] %v578
  %611 = vst [vmem:[#allocation2 + $0x50] sm:$0xff] %v579
  %612 = vst [vmem:[#allocation2 + $0x58] sm:$0xff] %v580
  %613 = vst [vmem:[#allocation2 + $0x60] sm:$0xff] %v581
  %614 = vst [vmem:[#allocation2 + $0x68] sm:$0xff] %v582
  %615 = vst [vmem:[#allocation2 + $0x70] sm:$0xff] %v583
  %616 = vst [vmem:[#allocation2 + $0x78] sm:$0xff] %v584
  %617 = vst [vmem:[#allocation2 + $0x80] sm:$0xff] %v585
  %618 = vst [vmem:[#allocation2 + $0x88] sm:$0xff] %v586
  %619 = vst [vmem:[#allocation2 + $0x90] sm:$0xff] %v587
  %620 = vst [vmem:[#allocation2 + $0x98] sm:$0xff] %v588
  %621 = vst [vmem:[#allocation2 + $0xa0] sm:$0xff] %v589
  %622 = vst [vmem:[#allocation2 + $0xa8] sm:$0xff] %v590
  %623 = vst [vmem:[#allocation2 + $0xb0] sm:$0xff] %v591
  %624 = vst [vmem:[#allocation2 + $0xb8] sm:$0xff] %v592
  %625 = vst [vmem:[#allocation2 + $0xc0] sm:$0xff] %v593
  %626 = vst [vmem:[#allocation2 + $0xc8] sm:$0xff] %v594
  %627 = vst [vmem:[#allocation2 + $0xd0] sm:$0xff] %v595
  %628 = vst [vmem:[#allocation2 + $0xd8] sm:$0xff] %v596
  %629 = vst [vmem:[#allocation2 + $0xe0] sm:$0xff] %v597
  %630 = vst [vmem:[#allocation2 + $0xe8] sm:$0xff] %v598
  %631 = vst [vmem:[#allocation2 + $0xf0] sm:$0xff] %v599
  %632 = vst [vmem:[#allocation2 + $0xf8] sm:$0xff] %v600
  // Predicated region
  $region18: #{gnn_maxcut_forward.3} parent=0 // pred_check
    %p633 = pneg %p15
  $region19: #{gnn_maxcut_forward.3} parent=0 // pred_check_branch
    %635 = sbr.rel (%p633) target = $region21
  $region20: #{gnn_maxcut_forward.3} parent=0 // pred_region
    %v636 = vld [vmem:[#allocation2] sm:$0xff]
    %v637 = vld [vmem:[#allocation2 + $0x8] sm:$0xff]
    %v638 = vld [vmem:[#allocation2 + $0x10] sm:$0xff]
    %v639 = vld [vmem:[#allocation2 + $0x18] sm:$0xff]
    %v640 = vld [vmem:[#allocation2 + $0x20] sm:$0xff]
    %v641 = vld [vmem:[#allocation2 + $0x28] sm:$0xff]
    %v642 = vld [vmem:[#allocation2 + $0x30] sm:$0xff]
    %v643 = vld [vmem:[#allocation2 + $0x38] sm:$0xff]
    %v644 = vld [vmem:[#allocation2 + $0x40] sm:$0xff]
    %v645 = vld [vmem:[#allocation2 + $0x48] sm:$0xff]
    %v646 = vld [vmem:[#allocation2 + $0x50] sm:$0xff]
    %v647 = vld [vmem:[#allocation2 + $0x58] sm:$0xff]
    %v648 = vld [vmem:[#allocation2 + $0x60] sm:$0xff]
    %v649 = vld [vmem:[#allocation2 + $0x68] sm:$0xff]
    %v650 = vld [vmem:[#allocation2 + $0x70] sm:$0xff]
    %v651 = vld [vmem:[#allocation2 + $0x78] sm:$0xff]
    %v652 = vld [vmem:[#allocation2 + $0x80] sm:$0xff]
    %v653 = vld [vmem:[#allocation2 + $0x88] sm:$0xff]
    %v654 = vld [vmem:[#allocation2 + $0x90] sm:$0xff]
    %v655 = vld [vmem:[#allocation2 + $0x98] sm:$0xff]
    %v656 = vld [vmem:[#allocation2 + $0xa0] sm:$0xff]
    %v657 = vld [vmem:[#allocation2 + $0xa8] sm:$0xff]
    %v658 = vld [vmem:[#allocation2 + $0xb0] sm:$0xff]
    %v659 = vld [vmem:[#allocation2 + $0xb8] sm:$0xff]
    %v660 = vld [vmem:[#allocation2 + $0xc0] sm:$0xff]
    %v661 = vld [vmem:[#allocation2 + $0xc8] sm:$0xff]
    %v662 = vld [vmem:[#allocation2 + $0xd0] sm:$0xff]
    %v663 = vld [vmem:[#allocation2 + $0xd8] sm:$0xff]
    %v664 = vld [vmem:[#allocation2 + $0xe0] sm:$0xff]
    %v665 = vld [vmem:[#allocation2 + $0xe8] sm:$0xff]
    %v666 = vld [vmem:[#allocation2 + $0xf0] sm:$0xff]
    %v667 = vld [vmem:[#allocation2 + $0xf8] sm:$0xff]
    %v668 = vld [vmem:[%s2] sm:$0x1]
    %v670 = vlaneseq
    %v671 = vshrl.u32 %v670, 7
    %v672 = vsub.s32 0, %v671
    %v673 = vrot.slane %v668, %v672
    %v675 = vadd.f32 %v636, %v673
    %v676 = vadd.f32 %v637, %v673
    %v677 = vadd.f32 %v638, %v673
    %v678 = vadd.f32 %v639, %v673
    %v679 = vadd.f32 %v640, %v673
    %v680 = vadd.f32 %v641, %v673
    %v681 = vadd.f32 %v642, %v673
    %v682 = vadd.f32 %v643, %v673
    %v683 = vadd.f32 %v644, %v673
    %v684 = vadd.f32 %v645, %v673
    %v685 = vadd.f32 %v646, %v673
    %v686 = vadd.f32 %v647, %v673
    %v687 = vadd.f32 %v648, %v673
    %v688 = vadd.f32 %v649, %v673
    %v689 = vadd.f32 %v650, %v673
    %v690 = vadd.f32 %v651, %v673
    %v691 = vadd.f32 %v652, %v673
    %v692 = vadd.f32 %v653, %v673
    %v693 = vadd.f32 %v654, %v673
    %v694 = vadd.f32 %v655, %v673
    %v695 = vadd.f32 %v656, %v673
    %v696 = vadd.f32 %v657, %v673
    %v697 = vadd.f32 %v658, %v673
    %v698 = vadd.f32 %v659, %v673
    %v699 = vadd.f32 %v660, %v673
    %v700 = vadd.f32 %v661, %v673
    %v701 = vadd.f32 %v662, %v673
    %v702 = vadd.f32 %v663, %v673
    %v703 = vadd.f32 %v664, %v673
    %v704 = vadd.f32 %v665, %v673
    %v705 = vadd.f32 %v666, %v673
    %v706 = vadd.f32 %v667, %v673
    %739 = vrot.lane.b32.xlu0 %v675, 1
    %v740 = vpop.permute.xlu0 %739
    %741 = vrot.lane.b32.xlu0 %v676, 1
    %v742 = vpop.permute.xlu0 %741
    %743 = vrot.lane.b32.xlu0 %v677, 1
    %v744 = vpop.permute.xlu0 %743
    %745 = vrot.lane.b32.xlu0 %v678, 1
    %v746 = vpop.permute.xlu0 %745
    %747 = vrot.lane.b32.xlu0 %v679, 1
    %v748 = vpop.permute.xlu0 %747
    %749 = vrot.lane.b32.xlu0 %v680, 1
    %v750 = vpop.permute.xlu0 %749
    %751 = vrot.lane.b32.xlu0 %v681, 1
    %v752 = vpop.permute.xlu0 %751
    %753 = vrot.lane.b32.xlu0 %v682, 1
    %v754 = vpop.permute.xlu0 %753
    %755 = vrot.lane.b32.xlu0 %v683, 1
    %v756 = vpop.permute.xlu0 %755
    %757 = vrot.lane.b32.xlu0 %v684, 1
    %v758 = vpop.permute.xlu0 %757
    %759 = vrot.lane.b32.xlu0 %v685, 1
    %v760 = vpop.permute.xlu0 %759
    %761 = vrot.lane.b32.xlu0 %v686, 1
    %v762 = vpop.permute.xlu0 %761
    %763 = vrot.lane.b32.xlu0 %v687, 1
    %v764 = vpop.permute.xlu0 %763
    %765 = vrot.lane.b32.xlu0 %v688, 1
    %v766 = vpop.permute.xlu0 %765
    %767 = vrot.lane.b32.xlu0 %v689, 1
    %v768 = vpop.permute.xlu0 %767
    %769 = vrot.lane.b32.xlu0 %v690, 1
    %v770 = vpop.permute.xlu0 %769
    %771 = vrot.lane.b32.xlu0 %v691, 1
    %v772 = vpop.permute.xlu0 %771
    %773 = vrot.lane.b32.xlu0 %v692, 1
    %v774 = vpop.permute.xlu0 %773
    %775 = vrot.lane.b32.xlu0 %v693, 1
    %v776 = vpop.permute.xlu0 %775
    %777 = vrot.lane.b32.xlu0 %v694, 1
    %v778 = vpop.permute.xlu0 %777
    %779 = vrot.lane.b32.xlu0 %v695, 1
    %v780 = vpop.permute.xlu0 %779
    %781 = vrot.lane.b32.xlu0 %v696, 1
    %v782 = vpop.permute.xlu0 %781
    %783 = vrot.lane.b32.xlu0 %v697, 1
    %v784 = vpop.permute.xlu0 %783
    %785 = vrot.lane.b32.xlu0 %v698, 1
    %v786 = vpop.permute.xlu0 %785
    %787 = vrot.lane.b32.xlu0 %v699, 1
    %v788 = vpop.permute.xlu0 %787
    %789 = vrot.lane.b32.xlu0 %v700, 1
    %v790 = vpop.permute.xlu0 %789
    %791 = vrot.lane.b32.xlu0 %v701, 1
    %v792 = vpop.permute.xlu0 %791
    %793 = vrot.lane.b32.xlu0 %v702, 1
    %v794 = vpop.permute.xlu0 %793
    %795 = vrot.lane.b32.xlu0 %v703, 1
    %v796 = vpop.permute.xlu0 %795
    %797 = vrot.lane.b32.xlu0 %v704, 1
    %v798 = vpop.permute.xlu0 %797
    %799 = vrot.lane.b32.xlu0 %v705, 1
    %v800 = vpop.permute.xlu0 %799
    %801 = vrot.lane.b32.xlu0 %v706, 1
    %v802 = vpop.permute.xlu0 %801
    %v835 = vsub.f32 %v675, %v740
    %v836 = vsub.f32 %v676, %v742
    %v837 = vsub.f32 %v677, %v744
    %v838 = vsub.f32 %v678, %v746
    %v839 = vsub.f32 %v679, %v748
    %v840 = vsub.f32 %v680, %v750
    %v841 = vsub.f32 %v681, %v752
    %v842 = vsub.f32 %v682, %v754
    %v843 = vsub.f32 %v683, %v756
    %v844 = vsub.f32 %v684, %v758
    %v845 = vsub.f32 %v685, %v760
    %v846 = vsub.f32 %v686, %v762
    %v847 = vsub.f32 %v687, %v764
    %v848 = vsub.f32 %v688, %v766
    %v849 = vsub.f32 %v689, %v768
    %v850 = vsub.f32 %v690, %v770
    %v851 = vsub.f32 %v691, %v772
    %v852 = vsub.f32 %v692, %v774
    %v853 = vsub.f32 %v693, %v776
    %v854 = vsub.f32 %v694, %v778
    %v855 = vsub.f32 %v695, %v780
    %v856 = vsub.f32 %v696, %v782
    %v857 = vsub.f32 %v697, %v784
    %v858 = vsub.f32 %v698, %v786
    %v859 = vsub.f32 %v699, %v788
    %v860 = vsub.f32 %v700, %v790
    %v861 = vsub.f32 %v701, %v792
    %v862 = vsub.f32 %v702, %v794
    %v863 = vsub.f32 %v703, %v796
    %v864 = vsub.f32 %v704, %v798
    %v865 = vsub.f32 %v705, %v800
    %v866 = vsub.f32 %v706, %v802
    %v867 = vlaneseq
    %v868 = vand.u32 %v867, 127
    %vm869 = vcmp.eq.s32.totalorder %v868, 0
    %v870 = vsub.f32 0.0, %v835
    %v871 = vsub.f32 0.0, %v836
    %v872 = vsub.f32 0.0, %v837
    %v873 = vsub.f32 0.0, %v838
    %v874 = vsub.f32 0.0, %v839
    %v875 = vsub.f32 0.0, %v840
    %v876 = vsub.f32 0.0, %v841
    %v877 = vsub.f32 0.0, %v842
    %v878 = vsub.f32 0.0, %v843
    %v879 = vsub.f32 0.0, %v844
    %v880 = vsub.f32 0.0, %v845
    %v881 = vsub.f32 0.0, %v846
    %v882 = vsub.f32 0.0, %v847
    %v883 = vsub.f32 0.0, %v848
    %v884 = vsub.f32 0.0, %v849
    %v885 = vsub.f32 0.0, %v850
    %v886 = vsub.f32 0.0, %v851
    %v887 = vsub.f32 0.0, %v852
    %v888 = vsub.f32 0.0, %v853
    %v889 = vsub.f32 0.0, %v854
    %v890 = vsub.f32 0.0, %v855
    %v891 = vsub.f32 0.0, %v856
    %v892 = vsub.f32 0.0, %v857
    %v893 = vsub.f32 0.0, %v858
    %v894 = vsub.f32 0.0, %v859
    %v895 = vsub.f32 0.0, %v860
    %v896 = vsub.f32 0.0, %v861
    %v897 = vsub.f32 0.0, %v862
    %v898 = vsub.f32 0.0, %v863
    %v899 = vsub.f32 0.0, %v864
    %v900 = vsub.f32 0.0, %v865
    %v901 = vsub.f32 0.0, %v866
    %903 = vset.pattern.permute.xlu0 1
    %904 = vperm.xlu0 %903, %v835
    %v905 = vpop.permute.xlu0 %904
    %908 = vset.pattern.permute.xlu0 1
    %909 = vperm.xlu0 %908, %v836
    %v910 = vpop.permute.xlu0 %909
    %913 = vset.pattern.permute.xlu0 1
    %914 = vperm.xlu0 %913, %v837
    %v915 = vpop.permute.xlu0 %914
    %918 = vset.pattern.permute.xlu0 1
    %919 = vperm.xlu0 %918, %v838
    %v920 = vpop.permute.xlu0 %919
    %923 = vset.pattern.permute.xlu0 1
    %924 = vperm.xlu0 %923, %v839
    %v925 = vpop.permute.xlu0 %924
    %928 = vset.pattern.permute.xlu0 1
    %929 = vperm.xlu0 %928, %v840
    %v930 = vpop.permute.xlu0 %929
    %933 = vset.pattern.permute.xlu0 1
    %934 = vperm.xlu0 %933, %v841
    %v935 = vpop.permute.xlu0 %934
    %938 = vset.pattern.permute.xlu0 1
    %939 = vperm.xlu0 %938, %v842
    %v940 = vpop.permute.xlu0 %939
    %943 = vset.pattern.permute.xlu0 1
    %944 = vperm.xlu0 %943, %v843
    %v945 = vpop.permute.xlu0 %944
    %948 = vset.pattern.permute.xlu0 1
    %949 = vperm.xlu0 %948, %v844
    %v950 = vpop.permute.xlu0 %949
    %953 = vset.pattern.permute.xlu0 1
    %954 = vperm.xlu0 %953, %v845
    %v955 = vpop.permute.xlu0 %954
    %958 = vset.pattern.permute.xlu0 1
    %959 = vperm.xlu0 %958, %v846
    %v960 = vpop.permute.xlu0 %959
    %963 = vset.pattern.permute.xlu0 1
    %964 = vperm.xlu0 %963, %v847
    %v965 = vpop.permute.xlu0 %964
    %968 = vset.pattern.permute.xlu0 1
    %969 = vperm.xlu0 %968, %v848
    %v970 = vpop.permute.xlu0 %969
    %973 = vset.pattern.permute.xlu0 1
    %974 = vperm.xlu0 %973, %v849
    %v975 = vpop.permute.xlu0 %974
    %978 = vset.pattern.permute.xlu0 1
    %979 = vperm.xlu0 %978, %v850
    %v980 = vpop.permute.xlu0 %979
    %983 = vset.pattern.permute.xlu0 1
    %984 = vperm.xlu0 %983, %v851
    %v985 = vpop.permute.xlu0 %984
    %988 = vset.pattern.permute.xlu0 1
    %989 = vperm.xlu0 %988, %v852
    %v990 = vpop.permute.xlu0 %989
    %993 = vset.pattern.permute.xlu0 1
    %994 = vperm.xlu0 %993, %v853
    %v995 = vpop.permute.xlu0 %994
    %998 = vset.pattern.permute.xlu0 1
    %999 = vperm.xlu0 %998, %v854
    %v1000 = vpop.permute.xlu0 %999
    %1003 = vset.pattern.permute.xlu0 1
    %1004 = vperm.xlu0 %1003, %v855
    %v1005 = vpop.permute.xlu0 %1004
    %1008 = vset.pattern.permute.xlu0 1
    %1009 = vperm.xlu0 %1008, %v856
    %v1010 = vpop.permute.xlu0 %1009
    %1013 = vset.pattern.permute.xlu0 1
    %1014 = vperm.xlu0 %1013, %v857
    %v1015 = vpop.permute.xlu0 %1014
    %1018 = vset.pattern.permute.xlu0 1
    %1019 = vperm.xlu0 %1018, %v858
    %v1020 = vpop.permute.xlu0 %1019
    %1023 = vset.pattern.permute.xlu0 1
    %1024 = vperm.xlu0 %1023, %v859
    %v1025 = vpop.permute.xlu0 %1024
    %1028 = vset.pattern.permute.xlu0 1
    %1029 = vperm.xlu0 %1028, %v860
    %v1030 = vpop.permute.xlu0 %1029
    %1033 = vset.pattern.permute.xlu0 1
    %1034 = vperm.xlu0 %1033, %v861
    %v1035 = vpop.permute.xlu0 %1034
    %1038 = vset.pattern.permute.xlu0 1
    %1039 = vperm.xlu0 %1038, %v862
    %v1040 = vpop.permute.xlu0 %1039
    %1043 = vset.pattern.permute.xlu0 1
    %1044 = vperm.xlu0 %1043, %v863
    %v1045 = vpop.permute.xlu0 %1044
    %1048 = vset.pattern.permute.xlu0 1
    %1049 = vperm.xlu0 %1048, %v864
    %v1050 = vpop.permute.xlu0 %1049
    %1053 = vset.pattern.permute.xlu0 1
    %1054 = vperm.xlu0 %1053, %v865
    %v1055 = vpop.permute.xlu0 %1054
    %1058 = vset.pattern.permute.xlu0 1
    %1059 = vperm.xlu0 %1058, %v866
    %v1060 = vpop.permute.xlu0 %1059
    %1063 = vset.pattern.permute.xlu0 1
    %1064 = vperm.xlu0 %1063, %v870
    %v1065 = vpop.permute.xlu0 %1064
    %1068 = vset.pattern.permute.xlu0 1
    %1069 = vperm.xlu0 %1068, %v871
    %v1070 = vpop.permute.xlu0 %1069
    %1073 = vset.pattern.permute.xlu0 1
    %1074 = vperm.xlu0 %1073, %v872
    %v1075 = vpop.permute.xlu0 %1074
    %1078 = vset.pattern.permute.xlu0 1
    %1079 = vperm.xlu0 %1078, %v873
    %v1080 = vpop.permute.xlu0 %1079
    %1083 = vset.pattern.permute.xlu0 1
    %1084 = vperm.xlu0 %1083, %v874
    %v1085 = vpop.permute.xlu0 %1084
    %1088 = vset.pattern.permute.xlu0 1
    %1089 = vperm.xlu0 %1088, %v875
    %v1090 = vpop.permute.xlu0 %1089
    %1093 = vset.pattern.permute.xlu0 1
    %1094 = vperm.xlu0 %1093, %v876
    %v1095 = vpop.permute.xlu0 %1094
    %1098 = vset.pattern.permute.xlu0 1
    %1099 = vperm.xlu0 %1098, %v877
    %v1100 = vpop.permute.xlu0 %1099
    %1103 = vset.pattern.permute.xlu0 1
    %1104 = vperm.xlu0 %1103, %v878
    %v1105 = vpop.permute.xlu0 %1104
    %1108 = vset.pattern.permute.xlu0 1
    %1109 = vperm.xlu0 %1108, %v879
    %v1110 = vpop.permute.xlu0 %1109
    %1113 = vset.pattern.permute.xlu0 1
    %1114 = vperm.xlu0 %1113, %v880
    %v1115 = vpop.permute.xlu0 %1114
    %1118 = vset.pattern.permute.xlu0 1
    %1119 = vperm.xlu0 %1118, %v881
    %v1120 = vpop.permute.xlu0 %1119
    %1123 = vset.pattern.permute.xlu0 1
    %1124 = vperm.xlu0 %1123, %v882
    %v1125 = vpop.permute.xlu0 %1124
    %1128 = vset.pattern.permute.xlu0 1
    %1129 = vperm.xlu0 %1128, %v883
    %v1130 = vpop.permute.xlu0 %1129
    %1133 = vset.pattern.permute.xlu0 1
    %1134 = vperm.xlu0 %1133, %v884
    %v1135 = vpop.permute.xlu0 %1134
    %1138 = vset.pattern.permute.xlu0 1
    %1139 = vperm.xlu0 %1138, %v885
    %v1140 = vpop.permute.xlu0 %1139
    %1143 = vset.pattern.permute.xlu0 1
    %1144 = vperm.xlu0 %1143, %v886
    %v1145 = vpop.permute.xlu0 %1144
    %1148 = vset.pattern.permute.xlu0 1
    %1149 = vperm.xlu0 %1148, %v887
    %v1150 = vpop.permute.xlu0 %1149
    %1153 = vset.pattern.permute.xlu0 1
    %1154 = vperm.xlu0 %1153, %v888
    %v1155 = vpop.permute.xlu0 %1154
    %1158 = vset.pattern.permute.xlu0 1
    %1159 = vperm.xlu0 %1158, %v889
    %v1160 = vpop.permute.xlu0 %1159
    %1163 = vset.pattern.permute.xlu0 1
    %1164 = vperm.xlu0 %1163, %v890
    %v1165 = vpop.permute.xlu0 %1164
    %1168 = vset.pattern.permute.xlu0 1
    %1169 = vperm.xlu0 %1168, %v891
    %v1170 = vpop.permute.xlu0 %1169
    %1173 = vset.pattern.permute.xlu0 1
    %1174 = vperm.xlu0 %1173, %v892
    %v1175 = vpop.permute.xlu0 %1174
    %1178 = vset.pattern.permute.xlu0 1
    %1179 = vperm.xlu0 %1178, %v893
    %v1180 = vpop.permute.xlu0 %1179
    %1183 = vset.pattern.permute.xlu0 1
    %1184 = vperm.xlu0 %1183, %v894
    %v1185 = vpop.permute.xlu0 %1184
    %1188 = vset.pattern.permute.xlu0 1
    %1189 = vperm.xlu0 %1188, %v895
    %v1190 = vpop.permute.xlu0 %1189
    %1193 = vset.pattern.permute.xlu0 1
    %1194 = vperm.xlu0 %1193, %v896
    %v1195 = vpop.permute.xlu0 %1194
    %1198 = vset.pattern.permute.xlu0 1
    %1199 = vperm.xlu0 %1198, %v897
    %v1200 = vpop.permute.xlu0 %1199
    %1203 = vset.pattern.permute.xlu0 1
    %1204 = vperm.xlu0 %1203, %v898
    %v1205 = vpop.permute.xlu0 %1204
    %1208 = vset.pattern.permute.xlu0 1
    %1209 = vperm.xlu0 %1208, %v899
    %v1210 = vpop.permute.xlu0 %1209
    %1213 = vset.pattern.permute.xlu0 1
    %1214 = vperm.xlu0 %1213, %v900
    %v1215 = vpop.permute.xlu0 %1214
    %1218 = vset.pattern.permute.xlu0 1
    %1219 = vperm.xlu0 %1218, %v901
    %v1220 = vpop.permute.xlu0 %1219
    %v1222 = vsel %vm869, %v905, %v1065
    %v1223 = vsel %vm869, %v910, %v1070
    %v1224 = vsel %vm869, %v915, %v1075
    %v1225 = vsel %vm869, %v920, %v1080
    %v1226 = vsel %vm869, %v925, %v1085
    %v1227 = vsel %vm869, %v930, %v1090
    %v1228 = vsel %vm869, %v935, %v1095
    %v1229 = vsel %vm869, %v940, %v1100
    %v1230 = vsel %vm869, %v945, %v1105
    %v1231 = vsel %vm869, %v950, %v1110
    %v1232 = vsel %vm869, %v955, %v1115
    %v1233 = vsel %vm869, %v960, %v1120
    %v1234 = vsel %vm869, %v965, %v1125
    %v1235 = vsel %vm869, %v970, %v1130
    %v1236 = vsel %vm869, %v975, %v1135
    %v1237 = vsel %vm869, %v980, %v1140
    %v1238 = vsel %vm869, %v985, %v1145
    %v1239 = vsel %vm869, %v990, %v1150
    %v1240 = vsel %vm869, %v995, %v1155
    %v1241 = vsel %vm869, %v1000, %v1160
    %v1242 = vsel %vm869, %v1005, %v1165
    %v1243 = vsel %vm869, %v1010, %v1170
    %v1244 = vsel %vm869, %v1015, %v1175
    %v1245 = vsel %vm869, %v1020, %v1180
    %v1246 = vsel %vm869, %v1025, %v1185
    %v1247 = vsel %vm869, %v1030, %v1190
    %v1248 = vsel %vm869, %v1035, %v1195
    %v1249 = vsel %vm869, %v1040, %v1200
    %v1250 = vsel %vm869, %v1045, %v1205
    %v1251 = vsel %vm869, %v1050, %v1210
    %v1252 = vsel %vm869, %v1055, %v1215
    %v1253 = vsel %vm869, %v1060, %v1220
    %v1254 = vmax.f32 %v1222, 0.0
    %v1255 = vmax.f32 %v1223, 0.0
    %v1256 = vmax.f32 %v1224, 0.0
    %v1257 = vmax.f32 %v1225, 0.0
    %v1258 = vmax.f32 %v1226, 0.0
    %v1259 = vmax.f32 %v1227, 0.0
    %v1260 = vmax.f32 %v1228, 0.0
    %v1261 = vmax.f32 %v1229, 0.0
    %v1262 = vmax.f32 %v1230, 0.0
    %v1263 = vmax.f32 %v1231, 0.0
    %v1264 = vmax.f32 %v1232, 0.0
    %v1265 = vmax.f32 %v1233, 0.0
    %v1266 = vmax.f32 %v1234, 0.0
    %v1267 = vmax.f32 %v1235, 0.0
    %v1268 = vmax.f32 %v1236, 0.0
    %v1269 = vmax.f32 %v1237, 0.0
    %v1270 = vmax.f32 %v1238, 0.0
    %v1271 = vmax.f32 %v1239, 0.0
    %v1272 = vmax.f32 %v1240, 0.0
    %v1273 = vmax.f32 %v1241, 0.0
    %v1274 = vmax.f32 %v1242, 0.0
    %v1275 = vmax.f32 %v1243, 0.0
    %v1276 = vmax.f32 %v1244, 0.0
    %v1277 = vmax.f32 %v1245, 0.0
    %v1278 = vmax.f32 %v1246, 0.0
    %v1279 = vmax.f32 %v1247, 0.0
    %v1280 = vmax.f32 %v1248, 0.0
    %v1281 = vmax.f32 %v1249, 0.0
    %v1282 = vmax.f32 %v1250, 0.0
    %v1283 = vmax.f32 %v1251, 0.0
    %v1284 = vmax.f32 %v1252, 0.0
    %v1285 = vmax.f32 %v1253, 0.0
    %v1286 = vand.u32 2147483647, %v1222
    %v1287 = vand.u32 2147483647, %v1223
    %v1288 = vand.u32 2147483647, %v1224
    %v1289 = vand.u32 2147483647, %v1225
    %v1290 = vand.u32 2147483647, %v1226
    %v1291 = vand.u32 2147483647, %v1227
    %v1292 = vand.u32 2147483647, %v1228
    %v1293 = vand.u32 2147483647, %v1229
    %v1294 = vand.u32 2147483647, %v1230
    %v1295 = vand.u32 2147483647, %v1231
    %v1296 = vand.u32 2147483647, %v1232
    %v1297 = vand.u32 2147483647, %v1233
    %v1298 = vand.u32 2147483647, %v1234
    %v1299 = vand.u32 2147483647, %v1235
    %v1300 = vand.u32 2147483647, %v1236
    %v1301 = vand.u32 2147483647, %v1237
    %v1302 = vand.u32 2147483647, %v1238
    %v1303 = vand.u32 2147483647, %v1239
    %v1304 = vand.u32 2147483647, %v1240
    %v1305 = vand.u32 2147483647, %v1241
    %v1306 = vand.u32 2147483647, %v1242
    %v1307 = vand.u32 2147483647, %v1243
    %v1308 = vand.u32 2147483647, %v1244
    %v1309 = vand.u32 2147483647, %v1245
    %v1310 = vand.u32 2147483647, %v1246
    %v1311 = vand.u32 2147483647, %v1247
    %v1312 = vand.u32 2147483647, %v1248
    %v1313 = vand.u32 2147483647, %v1249
    %v1314 = vand.u32 2147483647, %v1250
    %v1315 = vand.u32 2147483647, %v1251
    %v1316 = vand.u32 2147483647, %v1252
    %v1317 = vand.u32 2147483647, %v1253
    %v1318 = vsub.f32 0.0, %v1286
    %v1319 = vsub.f32 0.0, %v1287
    %v1320 = vsub.f32 0.0, %v1288
    %v1321 = vsub.f32 0.0, %v1289
    %v1322 = vsub.f32 0.0, %v1290
    %v1323 = vsub.f32 0.0, %v1291
    %v1324 = vsub.f32 0.0, %v1292
    %v1325 = vsub.f32 0.0, %v1293
    %v1326 = vsub.f32 0.0, %v1294
    %v1327 = vsub.f32 0.0, %v1295
    %v1328 = vsub.f32 0.0, %v1296
    %v1329 = vsub.f32 0.0, %v1297
    %v1330 = vsub.f32 0.0, %v1298
    %v1331 = vsub.f32 0.0, %v1299
    %v1332 = vsub.f32 0.0, %v1300
    %v1333 = vsub.f32 0.0, %v1301
    %v1334 = vsub.f32 0.0, %v1302
    %v1335 = vsub.f32 0.0, %v1303
    %v1336 = vsub.f32 0.0, %v1304
    %v1337 = vsub.f32 0.0, %v1305
    %v1338 = vsub.f32 0.0, %v1306
    %v1339 = vsub.f32 0.0, %v1307
    %v1340 = vsub.f32 0.0, %v1308
    %v1341 = vsub.f32 0.0, %v1309
    %v1342 = vsub.f32 0.0, %v1310
    %v1343 = vsub.f32 0.0, %v1311
    %v1344 = vsub.f32 0.0, %v1312
    %v1345 = vsub.f32 0.0, %v1313
    %v1346 = vsub.f32 0.0, %v1314
    %v1347 = vsub.f32 0.0, %v1315
    %v1348 = vsub.f32 0.0, %v1316
    %v1349 = vsub.f32 0.0, %v1317
    %v1350 = vmul.f32 %v1318, 1.442695
    %v1351 = vpow.pop %v1350
    %v1352 = vmul.f32 %v1319, 1.442695
    %v1353 = vpow.pop %v1352
    %v1354 = vmul.f32 %v1320, 1.442695
    %v1355 = vpow.pop %v1354
    %v1356 = vmul.f32 %v1321, 1.442695
    %v1357 = vpow.pop %v1356
    %v1358 = vmul.f32 %v1322, 1.442695
    %v1359 = vpow.pop %v1358
    %v1360 = vmul.f32 %v1323, 1.442695
    %v1361 = vpow.pop %v1360
    %v1362 = vmul.f32 %v1324, 1.442695
    %v1363 = vpow.pop %v1362
    %v1364 = vmul.f32 %v1325, 1.442695
    %v1365 = vpow.pop %v1364
    %v1366 = vmul.f32 %v1326, 1.442695
    %v1367 = vpow.pop %v1366
    %v1368 = vmul.f32 %v1327, 1.442695
    %v1369 = vpow.pop %v1368
    %v1370 = vmul.f32 %v1328, 1.442695
    %v1371 = vpow.pop %v1370
    %v1372 = vmul.f32 %v1329, 1.442695
    %v1373 = vpow.pop %v1372
    %v1374 = vmul.f32 %v1330, 1.442695
    %v1375 = vpow.pop %v1374
    %v1376 = vmul.f32 %v1331, 1.442695
    %v1377 = vpow.pop %v1376
    %v1378 = vmul.f32 %v1332, 1.442695
    %v1379 = vpow.pop %v1378
    %v1380 = vmul.f32 %v1333, 1.442695
    %v1381 = vpow.pop %v1380
    %v1382 = vmul.f32 %v1334, 1.442695
    %v1383 = vpow.pop %v1382
    %v1384 = vmul.f32 %v1335, 1.442695
    %v1385 = vpow.pop %v1384
    %v1386 = vmul.f32 %v1336, 1.442695
    %v1387 = vpow.pop %v1386
    %v1388 = vmul.f32 %v1337, 1.442695
    %v1389 = vpow.pop %v1388
    %v1390 = vmul.f32 %v1338, 1.442695
    %v1391 = vpow.pop %v1390
    %v1392 = vmul.f32 %v1339, 1.442695
    %v1393 = vpow.pop %v1392
    %v1394 = vmul.f32 %v1340, 1.442695
    %v1395 = vpow.pop %v1394
    %v1396 = vmul.f32 %v1341, 1.442695
    %v1397 = vpow.pop %v1396
    %v1398 = vmul.f32 %v1342, 1.442695
    %v1399 = vpow.pop %v1398
    %v1400 = vmul.f32 %v1343, 1.442695
    %v1401 = vpow.pop %v1400
    %v1402 = vmul.f32 %v1344, 1.442695
    %v1403 = vpow.pop %v1402
    %v1404 = vmul.f32 %v1345, 1.442695
    %v1405 = vpow.pop %v1404
    %v1406 = vmul.f32 %v1346, 1.442695
    %v1407 = vpow.pop %v1406
    %v1408 = vmul.f32 %v1347, 1.442695
    %v1409 = vpow.pop %v1408
    %v1410 = vmul.f32 %v1348, 1.442695
    %v1411 = vpow.pop %v1410
    %v1412 = vmul.f32 %v1349, 1.442695
    %v1413 = vpow.pop %v1412
    %v1414 = vadd.f32 %v1351, 1.0
    %v1415 = vlog2.pop %v1414
    %v1416 = vmul.f32 %v1415, 0.6931472
    %v1417 = vmul.f32 -0.5, %v1351
    %v1418 = vadd.f32 %v1417, 1.0
    %v1419 = vmul.f32 %v1418, %v1351
    %v1420 = vand.u32 2147483647, %v1351
    %vm1421 = vcmp.lt.f32.partialorder %v1420, 0.0004427343
    %v1422 = vsel %vm1421, %v1419, %v1416
    %v1423 = vadd.f32 %v1353, 1.0
    %v1424 = vlog2.pop %v1423
    %v1425 = vmul.f32 %v1424, 0.6931472
    %v1426 = vmul.f32 -0.5, %v1353
    %v1427 = vadd.f32 %v1426, 1.0
    %v1428 = vmul.f32 %v1427, %v1353
    %v1429 = vand.u32 2147483647, %v1353
    %vm1430 = vcmp.lt.f32.partialorder %v1429, 0.0004427343
    %v1431 = vsel %vm1430, %v1428, %v1425
    %v1432 = vadd.f32 %v1355, 1.0
    %v1433 = vlog2.pop %v1432
    %v1434 = vmul.f32 %v1433, 0.6931472
    %v1435 = vmul.f32 -0.5, %v1355
    %v1436 = vadd.f32 %v1435, 1.0
    %v1437 = vmul.f32 %v1436, %v1355
    %v1438 = vand.u32 2147483647, %v1355
    %vm1439 = vcmp.lt.f32.partialorder %v1438, 0.0004427343
    %v1440 = vsel %vm1439, %v1437, %v1434
    %v1441 = vadd.f32 %v1357, 1.0
    %v1442 = vlog2.pop %v1441
    %v1443 = vmul.f32 %v1442, 0.6931472
    %v1444 = vmul.f32 -0.5, %v1357
    %v1445 = vadd.f32 %v1444, 1.0
    %v1446 = vmul.f32 %v1445, %v1357
    %v1447 = vand.u32 2147483647, %v1357
    %vm1448 = vcmp.lt.f32.partialorder %v1447, 0.0004427343
    %v1449 = vsel %vm1448, %v1446, %v1443
    %v1450 = vadd.f32 %v1359, 1.0
    %v1451 = vlog2.pop %v1450
    %v1452 = vmul.f32 %v1451, 0.6931472
    %v1453 = vmul.f32 -0.5, %v1359
    %v1454 = vadd.f32 %v1453, 1.0
    %v1455 = vmul.f32 %v1454, %v1359
    %v1456 = vand.u32 2147483647, %v1359
    %vm1457 = vcmp.lt.f32.partialorder %v1456, 0.0004427343
    %v1458 = vsel %vm1457, %v1455, %v1452
    %v1459 = vadd.f32 %v1361, 1.0
    %v1460 = vlog2.pop %v1459
    %v1461 = vmul.f32 %v1460, 0.6931472
    %v1462 = vmul.f32 -0.5, %v1361
    %v1463 = vadd.f32 %v1462, 1.0
    %v1464 = vmul.f32 %v1463, %v1361
    %v1465 = vand.u32 2147483647, %v1361
    %vm1466 = vcmp.lt.f32.partialorder %v1465, 0.0004427343
    %v1467 = vsel %vm1466, %v1464, %v1461
    %v1468 = vadd.f32 %v1363, 1.0
    %v1469 = vlog2.pop %v1468
    %v1470 = vmul.f32 %v1469, 0.6931472
    %v1471 = vmul.f32 -0.5, %v1363
    %v1472 = vadd.f32 %v1471, 1.0
    %v1473 = vmul.f32 %v1472, %v1363
    %v1474 = vand.u32 2147483647, %v1363
    %vm1475 = vcmp.lt.f32.partialorder %v1474, 0.0004427343
    %v1476 = vsel %vm1475, %v1473, %v1470
    %v1477 = vadd.f32 %v1365, 1.0
    %v1478 = vlog2.pop %v1477
    %v1479 = vmul.f32 %v1478, 0.6931472
    %v1480 = vmul.f32 -0.5, %v1365
    %v1481 = vadd.f32 %v1480, 1.0
    %v1482 = vmul.f32 %v1481, %v1365
    %v1483 = vand.u32 2147483647, %v1365
    %vm1484 = vcmp.lt.f32.partialorder %v1483, 0.0004427343
    %v1485 = vsel %vm1484, %v1482, %v1479
    %v1486 = vadd.f32 %v1367, 1.0
    %v1487 = vlog2.pop %v1486
    %v1488 = vmul.f32 %v1487, 0.6931472
    %v1489 = vmul.f32 -0.5, %v1367
    %v1490 = vadd.f32 %v1489, 1.0
    %v1491 = vmul.f32 %v1490, %v1367
    %v1492 = vand.u32 2147483647, %v1367
    %vm1493 = vcmp.lt.f32.partialorder %v1492, 0.0004427343
    %v1494 = vsel %vm1493, %v1491, %v1488
    %v1495 = vadd.f32 %v1369, 1.0
    %v1496 = vlog2.pop %v1495
    %v1497 = vmul.f32 %v1496, 0.6931472
    %v1498 = vmul.f32 -0.5, %v1369
    %v1499 = vadd.f32 %v1498, 1.0
    %v1500 = vmul.f32 %v1499, %v1369
    %v1501 = vand.u32 2147483647, %v1369
    %vm1502 = vcmp.lt.f32.partialorder %v1501, 0.0004427343
    %v1503 = vsel %vm1502, %v1500, %v1497
    %v1504 = vadd.f32 %v1371, 1.0
    %v1505 = vlog2.pop %v1504
    %v1506 = vmul.f32 %v1505, 0.6931472
    %v1507 = vmul.f32 -0.5, %v1371
    %v1508 = vadd.f32 %v1507, 1.0
    %v1509 = vmul.f32 %v1508, %v1371
    %v1510 = vand.u32 2147483647, %v1371
    %vm1511 = vcmp.lt.f32.partialorder %v1510, 0.0004427343
    %v1512 = vsel %vm1511, %v1509, %v1506
    %v1513 = vadd.f32 %v1373, 1.0
    %v1514 = vlog2.pop %v1513
    %v1515 = vmul.f32 %v1514, 0.6931472
    %v1516 = vmul.f32 -0.5, %v1373
    %v1517 = vadd.f32 %v1516, 1.0
    %v1518 = vmul.f32 %v1517, %v1373
    %v1519 = vand.u32 2147483647, %v1373
    %vm1520 = vcmp.lt.f32.partialorder %v1519, 0.0004427343
    %v1521 = vsel %vm1520, %v1518, %v1515
    %v1522 = vadd.f32 %v1375, 1.0
    %v1523 = vlog2.pop %v1522
    %v1524 = vmul.f32 %v1523, 0.6931472
    %v1525 = vmul.f32 -0.5, %v1375
    %v1526 = vadd.f32 %v1525, 1.0
    %v1527 = vmul.f32 %v1526, %v1375
    %v1528 = vand.u32 2147483647, %v1375
    %vm1529 = vcmp.lt.f32.partialorder %v1528, 0.0004427343
    %v1530 = vsel %vm1529, %v1527, %v1524
    %v1531 = vadd.f32 %v1377, 1.0
    %v1532 = vlog2.pop %v1531
    %v1533 = vmul.f32 %v1532, 0.6931472
    %v1534 = vmul.f32 -0.5, %v1377
    %v1535 = vadd.f32 %v1534, 1.0
    %v1536 = vmul.f32 %v1535, %v1377
    %v1537 = vand.u32 2147483647, %v1377
    %vm1538 = vcmp.lt.f32.partialorder %v1537, 0.0004427343
    %v1539 = vsel %vm1538, %v1536, %v1533
    %v1540 = vadd.f32 %v1379, 1.0
    %v1541 = vlog2.pop %v1540
    %v1542 = vmul.f32 %v1541, 0.6931472
    %v1543 = vmul.f32 -0.5, %v1379
    %v1544 = vadd.f32 %v1543, 1.0
    %v1545 = vmul.f32 %v1544, %v1379
    %v1546 = vand.u32 2147483647, %v1379
    %vm1547 = vcmp.lt.f32.partialorder %v1546, 0.0004427343
    %v1548 = vsel %vm1547, %v1545, %v1542
    %v1549 = vadd.f32 %v1381, 1.0
    %v1550 = vlog2.pop %v1549
    %v1551 = vmul.f32 %v1550, 0.6931472
    %v1552 = vmul.f32 -0.5, %v1381
    %v1553 = vadd.f32 %v1552, 1.0
    %v1554 = vmul.f32 %v1553, %v1381
    %v1555 = vand.u32 2147483647, %v1381
    %vm1556 = vcmp.lt.f32.partialorder %v1555, 0.0004427343
    %v1557 = vsel %vm1556, %v1554, %v1551
    %v1558 = vadd.f32 %v1383, 1.0
    %v1559 = vlog2.pop %v1558
    %v1560 = vmul.f32 %v1559, 0.6931472
    %v1561 = vmul.f32 -0.5, %v1383
    %v1562 = vadd.f32 %v1561, 1.0
    %v1563 = vmul.f32 %v1562, %v1383
    %v1564 = vand.u32 2147483647, %v1383
    %vm1565 = vcmp.lt.f32.partialorder %v1564, 0.0004427343
    %v1566 = vsel %vm1565, %v1563, %v1560
    %v1567 = vadd.f32 %v1385, 1.0
    %v1568 = vlog2.pop %v1567
    %v1569 = vmul.f32 %v1568, 0.6931472
    %v1570 = vmul.f32 -0.5, %v1385
    %v1571 = vadd.f32 %v1570, 1.0
    %v1572 = vmul.f32 %v1571, %v1385
    %v1573 = vand.u32 2147483647, %v1385
    %vm1574 = vcmp.lt.f32.partialorder %v1573, 0.0004427343
    %v1575 = vsel %vm1574, %v1572, %v1569
    %v1576 = vadd.f32 %v1387, 1.0
    %v1577 = vlog2.pop %v1576
    %v1578 = vmul.f32 %v1577, 0.6931472
    %v1579 = vmul.f32 -0.5, %v1387
    %v1580 = vadd.f32 %v1579, 1.0
    %v1581 = vmul.f32 %v1580, %v1387
    %v1582 = vand.u32 2147483647, %v1387
    %vm1583 = vcmp.lt.f32.partialorder %v1582, 0.0004427343
    %v1584 = vsel %vm1583, %v1581, %v1578
    %v1585 = vadd.f32 %v1389, 1.0
    %v1586 = vlog2.pop %v1585
    %v1587 = vmul.f32 %v1586, 0.6931472
    %v1588 = vmul.f32 -0.5, %v1389
    %v1589 = vadd.f32 %v1588, 1.0
    %v1590 = vmul.f32 %v1589, %v1389
    %v1591 = vand.u32 2147483647, %v1389
    %vm1592 = vcmp.lt.f32.partialorder %v1591, 0.0004427343
    %v1593 = vsel %vm1592, %v1590, %v1587
    %v1594 = vadd.f32 %v1391, 1.0
    %v1595 = vlog2.pop %v1594
    %v1596 = vmul.f32 %v1595, 0.6931472
    %v1597 = vmul.f32 -0.5, %v1391
    %v1598 = vadd.f32 %v1597, 1.0
    %v1599 = vmul.f32 %v1598, %v1391
    %v1600 = vand.u32 2147483647, %v1391
    %vm1601 = vcmp.lt.f32.partialorder %v1600, 0.0004427343
    %v1602 = vsel %vm1601, %v1599, %v1596
    %v1603 = vadd.f32 %v1393, 1.0
    %v1604 = vlog2.pop %v1603
    %v1605 = vmul.f32 %v1604, 0.6931472
    %v1606 = vmul.f32 -0.5, %v1393
    %v1607 = vadd.f32 %v1606, 1.0
    %v1608 = vmul.f32 %v1607, %v1393
    %v1609 = vand.u32 2147483647, %v1393
    %vm1610 = vcmp.lt.f32.partialorder %v1609, 0.0004427343
    %v1611 = vsel %vm1610, %v1608, %v1605
    %v1612 = vadd.f32 %v1395, 1.0
    %v1613 = vlog2.pop %v1612
    %v1614 = vmul.f32 %v1613, 0.6931472
    %v1615 = vmul.f32 -0.5, %v1395
    %v1616 = vadd.f32 %v1615, 1.0
    %v1617 = vmul.f32 %v1616, %v1395
    %v1618 = vand.u32 2147483647, %v1395
    %vm1619 = vcmp.lt.f32.partialorder %v1618, 0.0004427343
    %v1620 = vsel %vm1619, %v1617, %v1614
    %v1621 = vadd.f32 %v1397, 1.0
    %v1622 = vlog2.pop %v1621
    %v1623 = vmul.f32 %v1622, 0.6931472
    %v1624 = vmul.f32 -0.5, %v1397
    %v1625 = vadd.f32 %v1624, 1.0
    %v1626 = vmul.f32 %v1625, %v1397
    %v1627 = vand.u32 2147483647, %v1397
    %vm1628 = vcmp.lt.f32.partialorder %v1627, 0.0004427343
    %v1629 = vsel %vm1628, %v1626, %v1623
    %v1630 = vadd.f32 %v1399, 1.0
    %v1631 = vlog2.pop %v1630
    %v1632 = vmul.f32 %v1631, 0.6931472
    %v1633 = vmul.f32 -0.5, %v1399
    %v1634 = vadd.f32 %v1633, 1.0
    %v1635 = vmul.f32 %v1634, %v1399
    %v1636 = vand.u32 2147483647, %v1399
    %vm1637 = vcmp.lt.f32.partialorder %v1636, 0.0004427343
    %v1638 = vsel %vm1637, %v1635, %v1632
    %v1639 = vadd.f32 %v1401, 1.0
    %v1640 = vlog2.pop %v1639
    %v1641 = vmul.f32 %v1640, 0.6931472
    %v1642 = vmul.f32 -0.5, %v1401
    %v1643 = vadd.f32 %v1642, 1.0
    %v1644 = vmul.f32 %v1643, %v1401
    %v1645 = vand.u32 2147483647, %v1401
    %vm1646 = vcmp.lt.f32.partialorder %v1645, 0.0004427343
    %v1647 = vsel %vm1646, %v1644, %v1641
    %v1648 = vadd.f32 %v1403, 1.0
    %v1649 = vlog2.pop %v1648
    %v1650 = vmul.f32 %v1649, 0.6931472
    %v1651 = vmul.f32 -0.5, %v1403
    %v1652 = vadd.f32 %v1651, 1.0
    %v1653 = vmul.f32 %v1652, %v1403
    %v1654 = vand.u32 2147483647, %v1403
    %vm1655 = vcmp.lt.f32.partialorder %v1654, 0.0004427343
    %v1656 = vsel %vm1655, %v1653, %v1650
    %v1657 = vadd.f32 %v1405, 1.0
    %v1658 = vlog2.pop %v1657
    %v1659 = vmul.f32 %v1658, 0.6931472
    %v1660 = vmul.f32 -0.5, %v1405
    %v1661 = vadd.f32 %v1660, 1.0
    %v1662 = vmul.f32 %v1661, %v1405
    %v1663 = vand.u32 2147483647, %v1405
    %vm1664 = vcmp.lt.f32.partialorder %v1663, 0.0004427343
    %v1665 = vsel %vm1664, %v1662, %v1659
    %v1666 = vadd.f32 %v1407, 1.0
    %v1667 = vlog2.pop %v1666
    %v1668 = vmul.f32 %v1667, 0.6931472
    %v1669 = vmul.f32 -0.5, %v1407
    %v1670 = vadd.f32 %v1669, 1.0
    %v1671 = vmul.f32 %v1670, %v1407
    %v1672 = vand.u32 2147483647, %v1407
    %vm1673 = vcmp.lt.f32.partialorder %v1672, 0.0004427343
    %v1674 = vsel %vm1673, %v1671, %v1668
    %v1675 = vadd.f32 %v1409, 1.0
    %v1676 = vlog2.pop %v1675
    %v1677 = vmul.f32 %v1676, 0.6931472
    %v1678 = vmul.f32 -0.5, %v1409
    %v1679 = vadd.f32 %v1678, 1.0
    %v1680 = vmul.f32 %v1679, %v1409
    %v1681 = vand.u32 2147483647, %v1409
    %vm1682 = vcmp.lt.f32.partialorder %v1681, 0.0004427343
    %v1683 = vsel %vm1682, %v1680, %v1677
    %v1684 = vadd.f32 %v1411, 1.0
    %v1685 = vlog2.pop %v1684
    %v1686 = vmul.f32 %v1685, 0.6931472
    %v1687 = vmul.f32 -0.5, %v1411
    %v1688 = vadd.f32 %v1687, 1.0
    %v1689 = vmul.f32 %v1688, %v1411
    %v1690 = vand.u32 2147483647, %v1411
    %vm1691 = vcmp.lt.f32.partialorder %v1690, 0.0004427343
    %v1692 = vsel %vm1691, %v1689, %v1686
    %v1693 = vadd.f32 %v1413, 1.0
    %v1694 = vlog2.pop %v1693
    %v1695 = vmul.f32 %v1694, 0.6931472
    %v1696 = vmul.f32 -0.5, %v1413
    %v1697 = vadd.f32 %v1696, 1.0
    %v1698 = vmul.f32 %v1697, %v1413
    %v1699 = vand.u32 2147483647, %v1413
    %vm1700 = vcmp.lt.f32.partialorder %v1699, 0.0004427343
    %v1701 = vsel %vm1700, %v1698, %v1695
    %v1702 = vadd.f32 %v1254, %v1422
    %v1703 = vadd.f32 %v1255, %v1431
    %v1704 = vadd.f32 %v1256, %v1440
    %v1705 = vadd.f32 %v1257, %v1449
    %v1706 = vadd.f32 %v1258, %v1458
    %v1707 = vadd.f32 %v1259, %v1467
    %v1708 = vadd.f32 %v1260, %v1476
    %v1709 = vadd.f32 %v1261, %v1485
    %v1710 = vadd.f32 %v1262, %v1494
    %v1711 = vadd.f32 %v1263, %v1503
    %v1712 = vadd.f32 %v1264, %v1512
    %v1713 = vadd.f32 %v1265, %v1521
    %v1714 = vadd.f32 %v1266, %v1530
    %v1715 = vadd.f32 %v1267, %v1539
    %v1716 = vadd.f32 %v1268, %v1548
    %v1717 = vadd.f32 %v1269, %v1557
    %v1718 = vadd.f32 %v1270, %v1566
    %v1719 = vadd.f32 %v1271, %v1575
    %v1720 = vadd.f32 %v1272, %v1584
    %v1721 = vadd.f32 %v1273, %v1593
    %v1722 = vadd.f32 %v1274, %v1602
    %v1723 = vadd.f32 %v1275, %v1611
    %v1724 = vadd.f32 %v1276, %v1620
    %v1725 = vadd.f32 %v1277, %v1629
    %v1726 = vadd.f32 %v1278, %v1638
    %v1727 = vadd.f32 %v1279, %v1647
    %v1728 = vadd.f32 %v1280, %v1656
    %v1729 = vadd.f32 %v1281, %v1665
    %v1730 = vadd.f32 %v1282, %v1674
    %v1731 = vadd.f32 %v1283, %v1683
    %v1732 = vadd.f32 %v1284, %v1692
    %v1733 = vadd.f32 %v1285, %v1701
    %v1734 = vsub.f32 0.0, %v1702
    %v1735 = vsub.f32 0.0, %v1703
    %v1736 = vsub.f32 0.0, %v1704
    %v1737 = vsub.f32 0.0, %v1705
    %v1738 = vsub.f32 0.0, %v1706
    %v1739 = vsub.f32 0.0, %v1707
    %v1740 = vsub.f32 0.0, %v1708
    %v1741 = vsub.f32 0.0, %v1709
    %v1742 = vsub.f32 0.0, %v1710
    %v1743 = vsub.f32 0.0, %v1711
    %v1744 = vsub.f32 0.0, %v1712
    %v1745 = vsub.f32 0.0, %v1713
    %v1746 = vsub.f32 0.0, %v1714
    %v1747 = vsub.f32 0.0, %v1715
    %v1748 = vsub.f32 0.0, %v1716
    %v1749 = vsub.f32 0.0, %v1717
    %v1750 = vsub.f32 0.0, %v1718
    %v1751 = vsub.f32 0.0, %v1719
    %v1752 = vsub.f32 0.0, %v1720
    %v1753 = vsub.f32 0.0, %v1721
    %v1754 = vsub.f32 0.0, %v1722
    %v1755 = vsub.f32 0.0, %v1723
    %v1756 = vsub.f32 0.0, %v1724
    %v1757 = vsub.f32 0.0, %v1725
    %v1758 = vsub.f32 0.0, %v1726
    %v1759 = vsub.f32 0.0, %v1727
    %v1760 = vsub.f32 0.0, %v1728
    %v1761 = vsub.f32 0.0, %v1729
    %v1762 = vsub.f32 0.0, %v1730
    %v1763 = vsub.f32 0.0, %v1731
    %v1764 = vsub.f32 0.0, %v1732
    %v1765 = vsub.f32 0.0, %v1733
    %1766 = vst [vmem:[%s3] sm:$0xff] %v1734
    %1767 = vst [vmem:[%s3 + $0x8] sm:$0xff] %v1735
    %1768 = vst [vmem:[%s3 + $0x10] sm:$0xff] %v1736
    %1769 = vst [vmem:[%s3 + $0x18] sm:$0xff] %v1737
    %1770 = vst [vmem:[%s3 + $0x20] sm:$0xff] %v1738
    %1771 = vst [vmem:[%s3 + $0x28] sm:$0xff] %v1739
    %1772 = vst [vmem:[%s3 + $0x30] sm:$0xff] %v1740
    %1773 = vst [vmem:[%s3 + $0x38] sm:$0xff] %v1741
    %1774 = vst [vmem:[%s3 + $0x40] sm:$0xff] %v1742
    %1775 = vst [vmem:[%s3 + $0x48] sm:$0xff] %v1743
    %1776 = vst [vmem:[%s3 + $0x50] sm:$0xff] %v1744
    %1777 = vst [vmem:[%s3 + $0x58] sm:$0xff] %v1745
    %1778 = vst [vmem:[%s3 + $0x60] sm:$0xff] %v1746
    %1779 = vst [vmem:[%s3 + $0x68] sm:$0xff] %v1747
    %1780 = vst [vmem:[%s3 + $0x70] sm:$0xff] %v1748
    %1781 = vst [vmem:[%s3 + $0x78] sm:$0xff] %v1749
    %1782 = vst [vmem:[%s3 + $0x80] sm:$0xff] %v1750
    %1783 = vst [vmem:[%s3 + $0x88] sm:$0xff] %v1751
    %1784 = vst [vmem:[%s3 + $0x90] sm:$0xff] %v1752
    %1785 = vst [vmem:[%s3 + $0x98] sm:$0xff] %v1753
    %1786 = vst [vmem:[%s3 + $0xa0] sm:$0xff] %v1754
    %1787 = vst [vmem:[%s3 + $0xa8] sm:$0xff] %v1755
    %1788 = vst [vmem:[%s3 + $0xb0] sm:$0xff] %v1756
    %1789 = vst [vmem:[%s3 + $0xb8] sm:$0xff] %v1757
    %1790 = vst [vmem:[%s3 + $0xc0] sm:$0xff] %v1758
    %1791 = vst [vmem:[%s3 + $0xc8] sm:$0xff] %v1759
    %1792 = vst [vmem:[%s3 + $0xd0] sm:$0xff] %v1760
    %1793 = vst [vmem:[%s3 + $0xd8] sm:$0xff] %v1761
    %1794 = vst [vmem:[%s3 + $0xe0] sm:$0xff] %v1762
    %1795 = vst [vmem:[%s3 + $0xe8] sm:$0xff] %v1763
    %1796 = vst [vmem:[%s3 + $0xf0] sm:$0xff] %v1764
    %1797 = vst [vmem:[%s3 + $0xf8] sm:$0xff] %v1765
  $region21: #{gnn_maxcut_forward.3} parent=0 // pred_fallthru
    _
  // Predicated region
  $region22: #{gnn_maxcut_forward.3} parent=0 // pred_check
    _
  $region23: #{gnn_maxcut_forward.3} parent=0 // pred_check_branch
    %1799 = sbr.rel (0) target = $region25
  $region24: #{gnn_maxcut_forward.3} parent=0 // pred_region
    _
  $region25: #{gnn_maxcut_forward.3} parent=0 // pred_fallthru
    _
  // Predicated region
  $region26: #{gnn_maxcut_forward.3} parent=0 // pred_check
    _
  $region27: #{gnn_maxcut_forward.3} parent=0 // pred_check_branch
    %1801 = sbr.rel (0) target = $region29
  $region28: #{gnn_maxcut_forward.3} parent=0 // pred_region
    _
  $region29: #{gnn_maxcut_forward.3} parent=0 // pred_fallthru
    _

</llo_original>
